<compile_context>
chip_gen: v5e
topology: v5e:2x2
jax: 0.10.0
libtpu: 0.0.40
codegen_flags: <defaults>
</compile_context>

<pallas_src>
import math

import jax
import jax.numpy as jnp
from jax import lax
from jax.experimental import pallas as pl
from jax.experimental.pallas import tpu as pltpu


# ----------------------------- configuration -------------------------------
# config.model.p_dims = [latent, hidden, n_items]  (decoder dims)
P_DIMS = [32, 64, 128]                       # small synthetic sizes
Q_DIMS = P_DIMS[::-1]                        # [128, 64, 32]
TEMP_Q_DIMS = Q_DIMS[:-1] + [Q_DIMS[-1] * 2] # [128, 64, 64]
LATENT = Q_DIMS[-1]                          # 32
HIDDEN = P_DIMS[1]                           # 64
N_ITEMS = Q_DIMS[0]                          # 128
ENC_OUT = 2 * LATENT                         # 64  (mu || logvar)
ENC_PAD = 128                                # lane-dense padded encoder output
COMBO_W = ENC_PAD + HIDDEN                   # 192 (enc(128) || dec-hidden(64))
BATCH = 256
ACT = jnp.tanh                               # config.model.act == 'tanh'


# ------------------------------- the kernel --------------------------------
def multivae_kernel(x_ref,
                    qw0_ref, qb0_ref,        # encoder layer 0
                    wc_ref, bc_ref,          # fused [q1_padded || q1_mu@p0]
                    pw1_ref, pb1_ref,        # decoder layer 1
                    out_ref, enc_ref):
    x = x_ref[...].astype(jnp.float32)

    # F.normalize(x, dim=1): x / max(||x||, 1e-12) == x * rsqrt(max(sumsq, 1e-24))
    sumsq = jnp.sum(x * x, axis=-1, keepdims=True)
    h = x * lax.rsqrt(jnp.maximum(sumsq, 1e-24))

    # dropout: identity in eval mode

    # ---- encoder layer 0 ---- (bf16 MXU inputs, f32 accumulate, f32 tanh)
    h = ACT(jnp.dot(h.astype(jnp.bfloat16), qw0_ref[...],
                    preferred_element_type=jnp.float32) + qb0_ref[...])

    # ---- fused pass: (mu || logvar || zero-pad) || decoder-hidden preact ----
    combo = jnp.dot(h.astype(jnp.bfloat16), wc_ref[...],
                    preferred_element_type=jnp.float32) + bc_ref[...]

    enc_ref[...] = combo[:, :ENC_PAD]          # lane-dense (128-wide) store

    # reparameterize (eval): z = mu, already folded into wc/bc composition
    dh = ACT(combo[:, ENC_PAD:])               # decoder hidden (width 64)

    # ---- decoder layer 1 ----
    out_ref[...] = jnp.dot(dh.astype(jnp.bfloat16), pw1_ref[...],
                           preferred_element_type=jnp.float32) + pb1_ref[...]


# --------------------------- fused parameter prep ---------------------------
def build_fused_params(params):
    """Compose q1(mu cols) @ p0 in f32 (exact: no nonlinearity between them),
    pad the encoder output to 128 lanes, and pack into one [HIDDEN, 192] weight."""
    qw0, qb0, qw1, qb1, pw0, pb0, pw1, pb1 = params
    qw1_f = qw1.astype(jnp.float32)
    pw0_f = pw0.astype(jnp.float32)

    w_fused = qw1_f[:, :LATENT] @ pw0_f                        # [HIDDEN, HIDDEN] f32
    b_fused = qb1[:, :LATENT] @ pw0_f + pb0                    # [1, HIDDEN] f32

    pad_w = jnp.zeros((HIDDEN, ENC_PAD - ENC_OUT), jnp.float32)
    pad_b = jnp.zeros((1, ENC_PAD - ENC_OUT), jnp.float32)

    wc = jnp.concatenate([qw1_f, pad_w, w_fused], axis=1).astype(jnp.bfloat16)
    bc = jnp.concatenate([qb1, pad_b, b_fused], axis=1)        # f32

    return (qw0, qb0, wc, bc, pw1, pb1)


# ------------------------------- the wrapper --------------------------------
def multivae_forward(x, params, *, vmem_budget_bytes=24 * 1024 * 1024):
    """x: [B, n_items] float32.  params: (qw0, qb0, qw1, qb1, pw0, pb0, pw1, pb1).

    Returns (logits [B, n_items], mu [B, LATENT], logvar [B, LATENT]) in f32.
    """
    fused = build_fused_params(params)
    B, n_items = x.shape

    # VMEM-budget-aware batch tile: per-row bytes for x / logits / enc tiles
    # (double-buffered) plus the resident weights.
    weight_bytes = sum(int(p.size) * p.dtype.itemsize for p in fused)
    bytes_per_row = 2 * 4 * (n_items + N_ITEMS + ENC_PAD)
    max_tile = max(8, int((vmem_budget_bytes - weight_bytes) // bytes_per_row) // 8 * 8)

    if B <= max_tile:
        # Single grid step: block == full array, no padding, no extra step cost.
        tile_b, grid_b, Bp = B, 1, B
        x_p = x
    else:
        tile_b = max_tile
        grid_b = pl.cdiv(B, tile_b)
        Bp = grid_b * tile_b
        x_p = jnp.pad(x, ((0, Bp - B), (0, 0))) if Bp != B else x  # zero rows safe

    flops = 2 * Bp * HIDDEN * (n_items + COMBO_W + N_ITEMS)
    transcendentals = Bp * (2 * HIDDEN + 1)                        # tanh x2 + rsqrt
    bytes_accessed = (int(x_p.size) * x_p.dtype.itemsize + weight_bytes
                      + Bp * (N_ITEMS + ENC_PAD) * 4)

    def _run(use_single_buffer):
        def batch_spec(width):
            return pl.BlockSpec((tile_b, width), lambda i: (i, 0))

        def resident_spec(arr):
            # full-array block, constant block index -> DMA'd once, VMEM-resident
            if use_single_buffer:
                return pl.BlockSpec(arr.shape, lambda i: (0, 0),
                                    pipeline_mode=pl.Buffered(1))
            return pl.BlockSpec(arr.shape, lambda i: (0, 0))

        in_specs = [batch_spec(n_items)] + [resident_spec(p) for p in fused]
        out_specs = (batch_spec(N_ITEMS), batch_spec(ENC_PAD))
        out_shape = (
            jax.ShapeDtypeStruct((Bp, N_ITEMS), jnp.float32),   # decoder logits
            jax.ShapeDtypeStruct((Bp, ENC_PAD), jnp.float32),   # mu || logvar || pad
        )
        return pl.pallas_call(
            multivae_kernel,
            out_shape=out_shape,
            grid=(grid_b,),
            in_specs=in_specs,
            out_specs=out_specs,
            compiler_params=pltpu.CompilerParams(
                dimension_semantics=("parallel",),      # shard batch over TCs (v7x)
                vmem_limit_bytes=32 * 1024 * 1024,
            ),
            cost_estimate=pl.CostEstimate(
                flops=flops,
                transcendentals=transcendentals,
                bytes_accessed=bytes_accessed),
        )(x_p, *fused)

    try:
        out, enc = _run(True)
    except Exception:
        # pipeline_mode=pl.Buffered(1) not supported on this jax build; the
        # default double-buffering of the tiny resident weights is harmless.
        out, enc = _run(False)

    out = out[:B]
    mu = enc[:B, :LATENT]
    logvar = enc[:B, LATENT:ENC_OUT]
    return out, mu, logvar


# --------------------------- parameter creation -----------------------------
def xavier_normal(key, d_in, d_out, dtype=jnp.bfloat16):
    # PyTorch xavier_normal_ on weight [d_out, d_in]; we store the transpose.
    std = math.sqrt(2.0 / (d_in + d_out))
    return (jax.random.normal(key, (d_in, d_out), jnp.float32) * std).astype(dtype)


def init_params(key):
    keys = jax.random.split(key, 8)
    # q_layers: Linear(128 -> 64), Linear(64 -> 64)
    qw0 = xavier_normal(keys[0], TEMP_Q_DIMS[0], TEMP_Q_DIMS[1])
    qb0 = jax.random.normal(keys[1], (1, TEMP_Q_DIMS[1]), jnp.float32) * 0.001
    qw1 = xavier_normal(keys[2], TEMP_Q_DIMS[1], TEMP_Q_DIMS[2])
    qb1 = jax.random.normal(keys[3], (1, TEMP_Q_DIMS[2]), jnp.float32) * 0.001
    # p_layers: Linear(32 -> 64), Linear(64 -> 128)
    pw0 = xavier_normal(keys[4], P_DIMS[0], P_DIMS[1])
    pb0 = jax.random.normal(keys[5], (1, P_DIMS[1]), jnp.float32) * 0.001
    pw1 = xavier_normal(keys[6], P_DIMS[1], P_DIMS[2])
    pb1 = jax.random.normal(keys[7], (1, P_DIMS[2]), jnp.float32) * 0.001
    return (qw0, qb0, qw1, qb1, pw0, pb0, pw1, pb1)


# ------------------------------ pure-JAX ref --------------------------------
def multivae_ref(x, params):
    # full-precision reference (weights upcast to f32)
    qw0, qb0, qw1, qb1, pw0, pb0, pw1, pb1 = [p.astype(jnp.float32) for p in params]
    norm = jnp.sqrt(jnp.sum(x * x, axis=-1, keepdims=True))
    h = x / jnp.maximum(norm, 1e-12)
    h = ACT(h @ qw0 + qb0)
    h = h @ qw1 + qb1
    mu, logvar = h[:, :LATENT], h[:, LATENT:]
    z = mu
    h = ACT(z @ pw0 + pb0)
    out = h @ pw1 + pb1
    return out, mu, logvar


# ---------------------------------- main ------------------------------------
if __name__ == "__main__":
    key = jax.random.PRNGKey(0)
    k_x, k_p = jax.random.split(key)
    # implicit "user x item" interaction-matrix style input
    x = jax.random.uniform(k_x, (BATCH, N_ITEMS), jnp.float32)
    params = init_params(k_p)

    out, mu, logvar = multivae_forward(x, params)
    jax.block_until_ready((out, mu, logvar))

    ref_out, ref_mu, ref_logvar = multivae_ref(x, params)
    # bf16 MXU inputs with f32 accumulation -> loosen tolerance vs. f32 ref
    assert jnp.allclose(out, ref_out, atol=2e-2, rtol=2e-2)
    assert jnp.allclose(mu, ref_mu, atol=2e-2, rtol=2e-2)
    assert jnp.allclose(logvar, ref_logvar, atol=2e-2, rtol=2e-2)

    print("KERNEL_OK")
</pallas_src>

<mosaic_0001>
module attributes {stable_mosaic.version = 11 : i64} {
  func.func @multivae_kernel(%arg0: i32, %arg1: memref<256x128xf32, #tpu.memory_space<vmem>>, %arg2: memref<128x64xbf16, #tpu.memory_space<vmem>>, %arg3: memref<1x64xf32, #tpu.memory_space<vmem>>, %arg4: memref<64x192xbf16, #tpu.memory_space<vmem>>, %arg5: memref<1x192xf32, #tpu.memory_space<vmem>>, %arg6: memref<64x128xbf16, #tpu.memory_space<vmem>>, %arg7: memref<1x128xf32, #tpu.memory_space<vmem>>, %arg8: memref<256x128xf32, #tpu.memory_space<vmem>>, %arg9: memref<256x128xf32, #tpu.memory_space<vmem>>) attributes {dimension_semantics = [#tpu.dimension_semantics<parallel>], iteration_bounds = array<i64: 1>, scalar_prefetch = 0 : i64, scratch_operands = 0 : i64, tpu.core_type = #tpu.core_type<tc>, window_params = [{transform_indices = @transform_0, window_bounds = array<i64: 256, 128>}, {pipeline_mode = #tpu.pipeline_mode<synchronous>, transform_indices = @transform_1, window_bounds = array<i64: 128, 64>}, {pipeline_mode = #tpu.pipeline_mode<synchronous>, transform_indices = @transform_2, window_bounds = array<i64: 1, 64>}, {pipeline_mode = #tpu.pipeline_mode<synchronous>, transform_indices = @transform_3, window_bounds = array<i64: 64, 192>}, {pipeline_mode = #tpu.pipeline_mode<synchronous>, transform_indices = @transform_4, window_bounds = array<i64: 1, 192>}, {pipeline_mode = #tpu.pipeline_mode<synchronous>, transform_indices = @transform_5, window_bounds = array<i64: 64, 128>}, {pipeline_mode = #tpu.pipeline_mode<synchronous>, transform_indices = @transform_6, window_bounds = array<i64: 1, 128>}, {transform_indices = @transform_7, window_bounds = array<i64: 256, 128>}, {transform_indices = @transform_8, window_bounds = array<i64: 256, 128>}]} {
    %c0 = arith.constant 0 : index
    %c0_0 = arith.constant 0 : index
    %0 = vector.load %arg1[%c0, %c0_0] : memref<256x128xf32, #tpu.memory_space<vmem>>, vector<256x128xf32>
    %1 = arith.mulf %0, %0 : vector<256x128xf32>
    %cst = arith.constant dense<0.000000e+00> : vector<256xf32>
    %2 = vector.multi_reduction <add>, %1, %cst [1] : vector<256x128xf32> to vector<256xf32>
    %3 = vector.shape_cast %2 : vector<256xf32> to vector<256x1xf32>
    %cst_1 = arith.constant 1.000000e-24 : f32
    %4 = vector.broadcast %cst_1 : f32 to vector<256x1xf32>
    %5 = arith.maximumf %3, %4 : vector<256x1xf32>
    %6 = math.rsqrt %5 : vector<256x1xf32>
    %7 = vector.broadcast %6 : vector<256x1xf32> to vector<256x128xf32>
    %8 = arith.mulf %0, %7 : vector<256x128xf32>
    %9 = arith.truncf %8 : vector<256x128xf32> to vector<256x128xbf16>
    %c0_2 = arith.constant 0 : index
    %c0_3 = arith.constant 0 : index
    %10 = vector.load %arg2[%c0_2, %c0_3] : memref<128x64xbf16, #tpu.memory_space<vmem>>, vector<128x64xbf16>
    %cst_4 = arith.constant dense<0.000000e+00> : vector<256x64xf32>
    %11 = tpu.matmul %9, %10, %cst_4 {dimension_numbers = #tpu.dot_dimension_numbers<[1], [0], [0], [1], [0, 0, 1, 1], [], []>} : vector<256x128xbf16>, vector<128x64xbf16>, vector<256x64xf32> -> vector<256x64xf32>
    %c0_5 = arith.constant 0 : index
    %c0_6 = arith.constant 0 : index
    %12 = vector.load %arg3[%c0_5, %c0_6] : memref<1x64xf32, #tpu.memory_space<vmem>>, vector<1x64xf32>
    %13 = vector.broadcast %12 : vector<1x64xf32> to vector<256x64xf32>
    %14 = arith.addf %11, %13 : vector<256x64xf32>
    %15 = math.tanh %14 : vector<256x64xf32>
    %16 = arith.truncf %15 : vector<256x64xf32> to vector<256x64xbf16>
    %c0_7 = arith.constant 0 : index
    %c0_8 = arith.constant 0 : index
    %17 = vector.load %arg4[%c0_7, %c0_8] : memref<64x192xbf16, #tpu.memory_space<vmem>>, vector<64x192xbf16>
    %cst_9 = arith.constant dense<0.000000e+00> : vector<256x192xf32>
    %18 = tpu.matmul %16, %17, %cst_9 {dimension_numbers = #tpu.dot_dimension_numbers<[1], [0], [0], [1], [0, 0, 1, 1], [], []>} : vector<256x64xbf16>, vector<64x192xbf16>, vector<256x192xf32> -> vector<256x192xf32>
    %c0_10 = arith.constant 0 : index
    %c0_11 = arith.constant 0 : index
    %19 = vector.load %arg5[%c0_10, %c0_11] : memref<1x192xf32, #tpu.memory_space<vmem>>, vector<1x192xf32>
    %20 = vector.broadcast %19 : vector<1x192xf32> to vector<256x192xf32>
    %21 = arith.addf %18, %20 : vector<256x192xf32>
    %22 = vector.extract_strided_slice %21 {offsets = [0, 0], sizes = [256, 128], strides = [1, 1]} : vector<256x192xf32> to vector<256x128xf32>
    %c0_12 = arith.constant 0 : index
    %c0_13 = arith.constant 0 : index
    %23 = vector.load %arg9[%c0_12, %c0_13] : memref<256x128xf32, #tpu.memory_space<vmem>>, vector<256x128xf32>
    tpu.vector_store %arg9[%c0_12, %c0_13], %22 {strides = array<i32>} : memref<256x128xf32, #tpu.memory_space<vmem>>, vector<256x128xf32>,
    %24 = vector.extract_strided_slice %21 {offsets = [0, 128], sizes = [256, 64], strides = [1, 1]} : vector<256x192xf32> to vector<256x64xf32>
    %25 = math.tanh %24 : vector<256x64xf32>
    %26 = arith.truncf %25 : vector<256x64xf32> to vector<256x64xbf16>
    %c0_14 = arith.constant 0 : index
    %c0_15 = arith.constant 0 : index
    %27 = vector.load %arg6[%c0_14, %c0_15] : memref<64x128xbf16, #tpu.memory_space<vmem>>, vector<64x128xbf16>
    %cst_16 = arith.constant dense<0.000000e+00> : vector<256x128xf32>
    %28 = tpu.matmul %26, %27, %cst_16 {dimension_numbers = #tpu.dot_dimension_numbers<[1], [0], [0], [1], [0, 0, 1, 1], [], []>} : vector<256x64xbf16>, vector<64x128xbf16>, vector<256x128xf32> -> vector<256x128xf32>
    %c0_17 = arith.constant 0 : index
    %c0_18 = arith.constant 0 : index
    %29 = vector.load %arg7[%c0_17, %c0_18] : memref<1x128xf32, #tpu.memory_space<vmem>>, vector<1x128xf32>
    %30 = vector.broadcast %29 : vector<1x128xf32> to vector<256x128xf32>
    %31 = arith.addf %28, %30 : vector<256x128xf32>
    %c0_19 = arith.constant 0 : index
    %c0_20 = arith.constant 0 : index
    %32 = vector.load %arg8[%c0_19, %c0_20] : memref<256x128xf32, #tpu.memory_space<vmem>>, vector<256x128xf32>
    tpu.vector_store %arg8[%c0_19, %c0_20], %31 {strides = array<i32>} : memref<256x128xf32, #tpu.memory_space<vmem>>, vector<256x128xf32>,
    return
  }
  func.func @transform_0(%arg0: i32) -> (i32, i32) {
    %c0_i32 = arith.constant 0 : i32
    %c0_i32_0 = arith.constant 0 : i32
    return %arg0, %c0_i32 : i32, i32
  }
  func.func @transform_1(%arg0: i32) -> (i32, i32) {
    %c0_i32 = arith.constant 0 : i32
    %c0_i32_0 = arith.constant 0 : i32
    %c0_i32_1 = arith.constant 0 : i32
    return %c0_i32, %c0_i32_0 : i32, i32
  }
  func.func @transform_2(%arg0: i32) -> (i32, i32) {
    %c0_i32 = arith.constant 0 : i32
    %c0_i32_0 = arith.constant 0 : i32
    %c0_i32_1 = arith.constant 0 : i32
    return %c0_i32, %c0_i32_0 : i32, i32
  }
  func.func @transform_3(%arg0: i32) -> (i32, i32) {
    %c0_i32 = arith.constant 0 : i32
    %c0_i32_0 = arith.constant 0 : i32
    %c0_i32_1 = arith.constant 0 : i32
    return %c0_i32, %c0_i32_0 : i32, i32
  }
  func.func @transform_4(%arg0: i32) -> (i32, i32) {
    %c0_i32 = arith.constant 0 : i32
    %c0_i32_0 = arith.constant 0 : i32
    %c0_i32_1 = arith.constant 0 : i32
    return %c0_i32, %c0_i32_0 : i32, i32
  }
  func.func @transform_5(%arg0: i32) -> (i32, i32) {
    %c0_i32 = arith.constant 0 : i32
    %c0_i32_0 = arith.constant 0 : i32
    %c0_i32_1 = arith.constant 0 : i32
    return %c0_i32, %c0_i32_0 : i32, i32
  }
  func.func @transform_6(%arg0: i32) -> (i32, i32) {
    %c0_i32 = arith.constant 0 : i32
    %c0_i32_0 = arith.constant 0 : i32
    %c0_i32_1 = arith.constant 0 : i32
    return %c0_i32, %c0_i32_0 : i32, i32
  }
  func.func @transform_7(%arg0: i32) -> (i32, i32) {
    %c0_i32 = arith.constant 0 : i32
    %c0_i32_0 = arith.constant 0 : i32
    return %arg0, %c0_i32 : i32, i32
  }
  func.func @transform_8(%arg0: i32) -> (i32, i32) {
    %c0_i32 = arith.constant 0 : i32
    %c0_i32_0 = arith.constant 0 : i32
    return %arg0, %c0_i32 : i32, i32
  }
}

module attributes {stable_mosaic.version = 11 : i64} {
  func.func @multivae_kernel(%arg0: i32, %arg1: memref<256x128xf32, #tpu.memory_space<vmem>>, %arg2: memref<128x64xbf16, #tpu.memory_space<vmem>>, %arg3: memref<1x64xf32, #tpu.memory_space<vmem>>, %arg4: memref<64x192xbf16, #tpu.memory_space<vmem>>, %arg5: memref<1x192xf32, #tpu.memory_space<vmem>>, %arg6: memref<64x128xbf16, #tpu.memory_space<vmem>>, %arg7: memref<1x128xf32, #tpu.memory_space<vmem>>, %arg8: memref<256x128xf32, #tpu.memory_space<vmem>>, %arg9: memref<256x128xf32, #tpu.memory_space<vmem>>) attributes {dimension_semantics = [#tpu.dimension_semantics<parallel>], iteration_bounds = array<i64: 1>, scalar_prefetch = 0 : i64, scratch_operands = 0 : i64, tpu.core_type = #tpu.core_type<tc>, window_params = [{transform_indices = @transform_0, window_bounds = array<i64: 256, 128>}, {pipeline_mode = #tpu.pipeline_mode<synchronous>, transform_indices = @transform_1, window_bounds = array<i64: 128, 64>}, {pipeline_mode = #tpu.pipeline_mode<synchronous>, transform_indices = @transform_2, window_bounds = array<i64: 1, 64>}, {pipeline_mode = #tpu.pipeline_mode<synchronous>, transform_indices = @transform_3, window_bounds = array<i64: 64, 192>}, {pipeline_mode = #tpu.pipeline_mode<synchronous>, transform_indices = @transform_4, window_bounds = array<i64: 1, 192>}, {pipeline_mode = #tpu.pipeline_mode<synchronous>, transform_indices = @transform_5, window_bounds = array<i64: 64, 128>}, {pipeline_mode = #tpu.pipeline_mode<synchronous>, transform_indices = @transform_6, window_bounds = array<i64: 1, 128>}, {transform_indices = @transform_7, window_bounds = array<i64: 256, 128>}, {transform_indices = @transform_8, window_bounds = array<i64: 256, 128>}]} {
    %c0 = arith.constant 0 : index
    %c0_0 = arith.constant 0 : index
    %0 = vector.load %arg1[%c0, %c0_0] : memref<256x128xf32, #tpu.memory_space<vmem>>, vector<256x128xf32>
    %1 = arith.mulf %0, %0 : vector<256x128xf32>
    %cst = arith.constant dense<0.000000e+00> : vector<256xf32>
    %2 = vector.multi_reduction <add>, %1, %cst [1] : vector<256x128xf32> to vector<256xf32>
    %3 = vector.shape_cast %2 : vector<256xf32> to vector<256x1xf32>
    %cst_1 = arith.constant 1.000000e-24 : f32
    %4 = vector.broadcast %cst_1 : f32 to vector<256x1xf32>
    %5 = arith.maximumf %3, %4 : vector<256x1xf32>
    %6 = math.rsqrt %5 : vector<256x1xf32>
    %7 = vector.broadcast %6 : vector<256x1xf32> to vector<256x128xf32>
    %8 = arith.mulf %0, %7 : vector<256x128xf32>
    %9 = arith.truncf %8 : vector<256x128xf32> to vector<256x128xbf16>
    %c0_2 = arith.constant 0 : index
    %c0_3 = arith.constant 0 : index
    %10 = vector.load %arg2[%c0_2, %c0_3] : memref<128x64xbf16, #tpu.memory_space<vmem>>, vector<128x64xbf16>
    %cst_4 = arith.constant dense<0.000000e+00> : vector<256x64xf32>
    %11 = tpu.matmul %9, %10, %cst_4 {dimension_numbers = #tpu.dot_dimension_numbers<[1], [0], [0], [1], [0, 0, 1, 1], [], []>} : vector<256x128xbf16>, vector<128x64xbf16>, vector<256x64xf32> -> vector<256x64xf32>
    %c0_5 = arith.constant 0 : index
    %c0_6 = arith.constant 0 : index
    %12 = vector.load %arg3[%c0_5, %c0_6] : memref<1x64xf32, #tpu.memory_space<vmem>>, vector<1x64xf32>
    %13 = vector.broadcast %12 : vector<1x64xf32> to vector<256x64xf32>
    %14 = arith.addf %11, %13 : vector<256x64xf32>
    %15 = math.tanh %14 : vector<256x64xf32>
    %16 = arith.truncf %15 : vector<256x64xf32> to vector<256x64xbf16>
    %c0_7 = arith.constant 0 : index
    %c0_8 = arith.constant 0 : index
    %17 = vector.load %arg4[%c0_7, %c0_8] : memref<64x192xbf16, #tpu.memory_space<vmem>>, vector<64x192xbf16>
    %cst_9 = arith.constant dense<0.000000e+00> : vector<256x192xf32>
    %18 = tpu.matmul %16, %17, %cst_9 {dimension_numbers = #tpu.dot_dimension_numbers<[1], [0], [0], [1], [0, 0, 1, 1], [], []>} : vector<256x64xbf16>, vector<64x192xbf16>, vector<256x192xf32> -> vector<256x192xf32>
    %c0_10 = arith.constant 0 : index
    %c0_11 = arith.constant 0 : index
    %19 = vector.load %arg5[%c0_10, %c0_11] : memref<1x192xf32, #tpu.memory_space<vmem>>, vector<1x192xf32>
    %20 = vector.broadcast %19 : vector<1x192xf32> to vector<256x192xf32>
    %21 = arith.addf %18, %20 : vector<256x192xf32>
    %22 = vector.extract_strided_slice %21 {offsets = [0, 0], sizes = [256, 128], strides = [1, 1]} : vector<256x192xf32> to vector<256x128xf32>
    %c0_12 = arith.constant 0 : index
    %c0_13 = arith.constant 0 : index
    %23 = vector.load %arg9[%c0_12, %c0_13] : memref<256x128xf32, #tpu.memory_space<vmem>>, vector<256x128xf32>
    tpu.vector_store %arg9[%c0_12, %c0_13], %22 {strides = array<i32>} : memref<256x128xf32, #tpu.memory_space<vmem>>, vector<256x128xf32>,
    %24 = vector.extract_strided_slice %21 {offsets = [0, 128], sizes = [256, 64], strides = [1, 1]} : vector<256x192xf32> to vector<256x64xf32>
    %25 = math.tanh %24 : vector<256x64xf32>
    %26 = arith.truncf %25 : vector<256x64xf32> to vector<256x64xbf16>
    %c0_14 = arith.constant 0 : index
    %c0_15 = arith.constant 0 : index
    %27 = vector.load %arg6[%c0_14, %c0_15] : memref<64x128xbf16, #tpu.memory_space<vmem>>, vector<64x128xbf16>
    %cst_16 = arith.constant dense<0.000000e+00> : vector<256x128xf32>
    %28 = tpu.matmul %26, %27, %cst_16 {dimension_numbers = #tpu.dot_dimension_numbers<[1], [0], [0], [1], [0, 0, 1, 1], [], []>} : vector<256x64xbf16>, vector<64x128xbf16>, vector<256x128xf32> -> vector<256x128xf32>
    %c0_17 = arith.constant 0 : index
    %c0_18 = arith.constant 0 : index
    %29 = vector.load %arg7[%c0_17, %c0_18] : memref<1x128xf32, #tpu.memory_space<vmem>>, vector<1x128xf32>
    %30 = vector.broadcast %29 : vector<1x128xf32> to vector<256x128xf32>
    %31 = arith.addf %28, %30 : vector<256x128xf32>
    %c0_19 = arith.constant 0 : index
    %c0_20 = arith.constant 0 : index
    %32 = vector.load %arg8[%c0_19, %c0_20] : memref<256x128xf32, #tpu.memory_space<vmem>>, vector<256x128xf32>
    tpu.vector_store %arg8[%c0_19, %c0_20], %31 {strides = array<i32>} : memref<256x128xf32, #tpu.memory_space<vmem>>, vector<256x128xf32>,
    return
  }
  func.func @transform_0(%arg0: i32) -> (i32, i32) {
    %c0_i32 = arith.constant 0 : i32
    %c0_i32_0 = arith.constant 0 : i32
    return %arg0, %c0_i32 : i32, i32
  }
  func.func @transform_1(%arg0: i32) -> (i32, i32) {
    %c0_i32 = arith.constant 0 : i32
    %c0_i32_0 = arith.constant 0 : i32
    %c0_i32_1 = arith.constant 0 : i32
    return %c0_i32, %c0_i32_0 : i32, i32
  }
  func.func @transform_2(%arg0: i32) -> (i32, i32) {
    %c0_i32 = arith.constant 0 : i32
    %c0_i32_0 = arith.constant 0 : i32
    %c0_i32_1 = arith.constant 0 : i32
    return %c0_i32, %c0_i32_0 : i32, i32
  }
  func.func @transform_3(%arg0: i32) -> (i32, i32) {
    %c0_i32 = arith.constant 0 : i32
    %c0_i32_0 = arith.constant 0 : i32
    %c0_i32_1 = arith.constant 0 : i32
    return %c0_i32, %c0_i32_0 : i32, i32
  }
  func.func @transform_4(%arg0: i32) -> (i32, i32) {
    %c0_i32 = arith.constant 0 : i32
    %c0_i32_0 = arith.constant 0 : i32
    %c0_i32_1 = arith.constant 0 : i32
    return %c0_i32, %c0_i32_0 : i32, i32
  }
  func.func @transform_5(%arg0: i32) -> (i32, i32) {
    %c0_i32 = arith.constant 0 : i32
    %c0_i32_0 = arith.constant 0 : i32
    %c0_i32_1 = arith.constant 0 : i32
    return %c0_i32, %c0_i32_0 : i32, i32
  }
  func.func @transform_6(%arg0: i32) -> (i32, i32) {
    %c0_i32 = arith.constant 0 : i32
    %c0_i32_0 = arith.constant 0 : i32
    %c0_i32_1 = arith.constant 0 : i32
    return %c0_i32, %c0_i32_0 : i32, i32
  }
  func.func @transform_7(%arg0: i32) -> (i32, i32) {
    %c0_i32 = arith.constant 0 : i32
    %c0_i32_0 = arith.constant 0 : i32
    return %arg0, %c0_i32 : i32, i32
  }
  func.func @transform_8(%arg0: i32) -> (i32, i32) {
    %c0_i32 = arith.constant 0 : i32
    %c0_i32_0 = arith.constant 0 : i32
    return %arg0, %c0_i32 : i32, i32
  }
}

</mosaic_0001>

<llo_original>
// kernel: tpu_custom_call.1
$region0: #{tpu_custom_call.1}
  #allocation0 [shape = 'u32[]', space=smem, size = 0x4, offset = 0x4, fixed_abs, tag = 'smem constant byte address 0x4 - core index']
  #allocation1 [shape = 'u32[72,128]{1,0:T(1,128)}', space=vmem, size = 0x9000, scoped, tag = 'internal scratch']
  %s0 = inlined_call_operand.hbm [shape: f32[256,128], index: 0, kind: input, shape index: {}]
  %s1 = inlined_call_operand.vmem [shape: bf16[128,64], index: 1, kind: input, shape index: {}]
  %s2 = inlined_call_operand.hbm [shape: f32[1,64], index: 2, kind: input, shape index: {}]
  %s3 = inlined_call_operand.vmem [shape: bf16[64,192], index: 3, kind: input, shape index: {}]
  %s4 = inlined_call_operand.vmem [shape: f32[1,192], index: 4, kind: input, shape index: {}]
  %s5 = inlined_call_operand.vmem [shape: bf16[64,128], index: 5, kind: input, shape index: {}]
  %s6 = inlined_call_operand.vmem [shape: f32[1,128], index: 6, kind: input, shape index: {}]
  %s7 = inlined_call_operand.hbm [shape: f32[256,128], index: 7, kind: output, shape index: {0}]
  %s8 = inlined_call_operand.hbm [shape: f32[256,128], index: 8, kind: output, shape index: {1}]
  %9 = xla_tuple %s7, %s8
  %s10 = sld [smem:[#allocation0]]
  $region54: #{tpu_custom_call.1} parent=0
    _
  %s12 = ssub.s32 1, %s10
  %s13 = scalar_select 0, %s12, %s10
  $region1: #{tpu_custom_call.1} parent=0
    #allocation2 [shape = 'u8[131072]{0}', space=vmem, size = 0x20000, scoped, tag = 'input window, operand 0, single buffered']
    #allocation3 [shape = 's32[1]{0}', space=sflag, size = 0x4, scoped, tag = 'scoped memory for tpu_custom_call.1']
    #allocation4 [shape = 's32[1]{0}', space=sflag, size = 0x4, scoped, tag = 'scoped memory for tpu_custom_call.1']
    #allocation5 [shape = 'u8[512]{0}', space=vmem, size = 0x400, scoped, tag = 'input window, operand 2, single buffered']
    #allocation6 [shape = 's32[1]{0}', space=sflag, size = 0x4, scoped, tag = 'scoped memory for tpu_custom_call.1']
    #allocation7 [shape = 'u8[131072]{0}', space=vmem, size = 0x20000, scoped, tag = 'output window, operand 0, single buffered']
    #allocation8 [shape = 'u8[131072]{0}', space=vmem, size = 0x20000, scoped, tag = 'output window, operand 1, single buffered']
    #allocation9 [shape = 's32[1]{0}', space=sflag, size = 0x4, scoped, tag = 'scoped memory for tpu_custom_call.1']
    %14 = vsyncpa [#allocation3], 0
    %15 = vsyncpa [#allocation6], 0
    %16 = vsyncpa [#allocation4], 0
    %17 = vsyncpa [#allocation9], 0
    // Predicated region
    $region2: #{tpu_custom_call.1} parent=1 // pred_check
      _
    $region3: #{tpu_custom_call.1} parent=1 // pred_check_branch
      %19 = sbr.rel (0) target = $region5
    $region4: #{tpu_custom_call.1} parent=1 // pred_region
      %21 = vsyncadd [#allocation3], 0
      %s22 = sshll.u32 %s0, 4
      %s23 = int_to_ptr.hbm [resolvable:$true] %s22
      %s24 = sshll.u32 [#allocation2], 4
      %s25 = int_to_ptr.vmem [resolvable:$true] %s24
      %30 = dma.hbm_to_vmem [thread:$0]  %s23, 4096, %s25, [#allocation3], 128, 128, 8
    $region5: #{tpu_custom_call.1} parent=1 // pred_fallthru
      _
    // Predicated region
    $region6: #{tpu_custom_call.1} parent=1 // pred_check
      _
    $region7: #{tpu_custom_call.1} parent=1 // pred_check_branch
      %32 = sbr.rel (0) target = $region9
    $region8: #{tpu_custom_call.1} parent=1 // pred_region
      _
    $region9: #{tpu_custom_call.1} parent=1 // pred_fallthru
      _
    // Predicated region
    $region10: #{tpu_custom_call.1} parent=1 // pred_check
      _
    $region11: #{tpu_custom_call.1} parent=1 // pred_check_branch
      %34 = sbr.rel (0) target = $region13
    $region12: #{tpu_custom_call.1} parent=1 // pred_region
      %36 = vsyncadd [#allocation6], 0
      %s38 = sshll.u32 %s2, 4
      %s39 = int_to_ptr.hbm [resolvable:$true] %s38
      %s40 = sshll.u32 [#allocation5], 4
      %s41 = int_to_ptr.vmem [resolvable:$true] %s40
      %43 = dma.hbm_to_vmem [thread:$0]  %s39, 16, %s41, [#allocation6]
    $region13: #{tpu_custom_call.1} parent=1 // pred_fallthru
      _
    // Predicated region
    $region14: #{tpu_custom_call.1} parent=1 // pred_check
      _
    $region15: #{tpu_custom_call.1} parent=1 // pred_check_branch
      %45 = sbr.rel (0) target = $region17
    $region16: #{tpu_custom_call.1} parent=1 // pred_region
      _
    $region17: #{tpu_custom_call.1} parent=1 // pred_fallthru
      _
    // Predicated region
    $region18: #{tpu_custom_call.1} parent=1 // pred_check
      _
    $region19: #{tpu_custom_call.1} parent=1 // pred_check_branch
      %47 = sbr.rel (0) target = $region21
    $region20: #{tpu_custom_call.1} parent=1 // pred_region
      _
    $region21: #{tpu_custom_call.1} parent=1 // pred_fallthru
      _
    // Predicated region
    $region22: #{tpu_custom_call.1} parent=1 // pred_check
      _
    $region23: #{tpu_custom_call.1} parent=1 // pred_check_branch
      %49 = sbr.rel (0) target = $region25
    $region24: #{tpu_custom_call.1} parent=1 // pred_region
      _
    $region25: #{tpu_custom_call.1} parent=1 // pred_fallthru
      _
    // Predicated region
    $region26: #{tpu_custom_call.1} parent=1 // pred_check
      _
    $region27: #{tpu_custom_call.1} parent=1 // pred_check_branch
      %51 = sbr.rel (0) target = $region29
    $region28: #{tpu_custom_call.1} parent=1 // pred_region
      _
    $region29: #{tpu_custom_call.1} parent=1 // pred_fallthru
      _
    // Predicated region
    $region30: #{tpu_custom_call.1} parent=1 // pred_check
      _
    $region31: #{tpu_custom_call.1} parent=1 // pred_check_branch
      %53 = sbr.rel (0) target = $region33
    $region32: #{tpu_custom_call.1} parent=1 // pred_region
      %55 = dma.done [#allocation3], 4096
    $region33: #{tpu_custom_call.1} parent=1 // pred_fallthru
      _
    // Predicated region
    $region34: #{tpu_custom_call.1} parent=1 // pred_check
      _
    $region35: #{tpu_custom_call.1} parent=1 // pred_check_branch
      %57 = sbr.rel (0) target = $region37
    $region36: #{tpu_custom_call.1} parent=1 // pred_region
      %59 = dma.done [#allocation6], 16
    $region37: #{tpu_custom_call.1} parent=1 // pred_fallthru
      _
    %v61 = vld [vmem:[#allocation2] sm:$0xff]
    %v62 = vld [vmem:[#allocation2 + $0x8] sm:$0xff]
    %v63 = vld [vmem:[#allocation2 + $0x10] sm:$0xff]
    %v64 = vld [vmem:[#allocation2 + $0x18] sm:$0xff]
    %v65 = vld [vmem:[#allocation2 + $0x20] sm:$0xff]
    %v66 = vld [vmem:[#allocation2 + $0x28] sm:$0xff]
    %v67 = vld [vmem:[#allocation2 + $0x30] sm:$0xff]
    %v68 = vld [vmem:[#allocation2 + $0x38] sm:$0xff]
    %v69 = vld [vmem:[#allocation2 + $0x40] sm:$0xff]
    %v70 = vld [vmem:[#allocation2 + $0x48] sm:$0xff]
    %v71 = vld [vmem:[#allocation2 + $0x50] sm:$0xff]
    %v72 = vld [vmem:[#allocation2 + $0x58] sm:$0xff]
    %v73 = vld [vmem:[#allocation2 + $0x60] sm:$0xff]
    %v74 = vld [vmem:[#allocation2 + $0x68] sm:$0xff]
    %v75 = vld [vmem:[#allocation2 + $0x70] sm:$0xff]
    %v76 = vld [vmem:[#allocation2 + $0x78] sm:$0xff]
    %v77 = vld [vmem:[#allocation2 + $0x80] sm:$0xff]
    %v78 = vld [vmem:[#allocation2 + $0x88] sm:$0xff]
    %v79 = vld [vmem:[#allocation2 + $0x90] sm:$0xff]
    %v80 = vld [vmem:[#allocation2 + $0x98] sm:$0xff]
    %v81 = vld [vmem:[#allocation2 + $0xa0] sm:$0xff]
    %v82 = vld [vmem:[#allocation2 + $0xa8] sm:$0xff]
    %v83 = vld [vmem:[#allocation2 + $0xb0] sm:$0xff]
    %v84 = vld [vmem:[#allocation2 + $0xb8] sm:$0xff]
    %v85 = vld [vmem:[#allocation2 + $0xc0] sm:$0xff]
    %v86 = vld [vmem:[#allocation2 + $0xc8] sm:$0xff]
    %v87 = vld [vmem:[#allocation2 + $0xd0] sm:$0xff]
    %v88 = vld [vmem:[#allocation2 + $0xd8] sm:$0xff]
    %v89 = vld [vmem:[#allocation2 + $0xe0] sm:$0xff]
    %v90 = vld [vmem:[#allocation2 + $0xe8] sm:$0xff]
    %v91 = vld [vmem:[#allocation2 + $0xf0] sm:$0xff]
    %v92 = vld [vmem:[#allocation2 + $0xf8] sm:$0xff]
    %v93 = vmul.f32 %v61, %v61
    %v94 = vmul.f32 %v62, %v62
    %v95 = vmul.f32 %v63, %v63
    %v96 = vmul.f32 %v64, %v64
    %v97 = vmul.f32 %v65, %v65
    %v98 = vmul.f32 %v66, %v66
    %v99 = vmul.f32 %v67, %v67
    %v100 = vmul.f32 %v68, %v68
    %v101 = vmul.f32 %v69, %v69
    %v102 = vmul.f32 %v70, %v70
    %v103 = vmul.f32 %v71, %v71
    %v104 = vmul.f32 %v72, %v72
    %v105 = vmul.f32 %v73, %v73
    %v106 = vmul.f32 %v74, %v74
    %v107 = vmul.f32 %v75, %v75
    %v108 = vmul.f32 %v76, %v76
    %v109 = vmul.f32 %v77, %v77
    %v110 = vmul.f32 %v78, %v78
    %v111 = vmul.f32 %v79, %v79
    %v112 = vmul.f32 %v80, %v80
    %v113 = vmul.f32 %v81, %v81
    %v114 = vmul.f32 %v82, %v82
    %v115 = vmul.f32 %v83, %v83
    %v116 = vmul.f32 %v84, %v84
    %v117 = vmul.f32 %v85, %v85
    %v118 = vmul.f32 %v86, %v86
    %v119 = vmul.f32 %v87, %v87
    %v120 = vmul.f32 %v88, %v88
    %v121 = vmul.f32 %v89, %v89
    %v122 = vmul.f32 %v90, %v90
    %v123 = vmul.f32 %v91, %v91
    %v124 = vmul.f32 %v92, %v92
    %125 = vadd.xlane.f32.xlu0 %v93
    %v126 = vpop.xlane.xlu0 %125
    %127 = vadd.xlane.f32.xlu0 %v94
    %v128 = vpop.xlane.xlu0 %127
    %129 = vadd.xlane.f32.xlu0 %v95
    %v130 = vpop.xlane.xlu0 %129
    %131 = vadd.xlane.f32.xlu0 %v96
    %v132 = vpop.xlane.xlu0 %131
    %133 = vadd.xlane.f32.xlu0 %v97
    %v134 = vpop.xlane.xlu0 %133
    %135 = vadd.xlane.f32.xlu0 %v98
    %v136 = vpop.xlane.xlu0 %135
    %137 = vadd.xlane.f32.xlu0 %v99
    %v138 = vpop.xlane.xlu0 %137
    %139 = vadd.xlane.f32.xlu0 %v100
    %v140 = vpop.xlane.xlu0 %139
    %141 = vadd.xlane.f32.xlu0 %v101
    %v142 = vpop.xlane.xlu0 %141
    %143 = vadd.xlane.f32.xlu0 %v102
    %v144 = vpop.xlane.xlu0 %143
    %145 = vadd.xlane.f32.xlu0 %v103
    %v146 = vpop.xlane.xlu0 %145
    %147 = vadd.xlane.f32.xlu0 %v104
    %v148 = vpop.xlane.xlu0 %147
    %149 = vadd.xlane.f32.xlu0 %v105
    %v150 = vpop.xlane.xlu0 %149
    %151 = vadd.xlane.f32.xlu0 %v106
    %v152 = vpop.xlane.xlu0 %151
    %153 = vadd.xlane.f32.xlu0 %v107
    %v154 = vpop.xlane.xlu0 %153
    %155 = vadd.xlane.f32.xlu0 %v108
    %v156 = vpop.xlane.xlu0 %155
    %157 = vadd.xlane.f32.xlu0 %v109
    %v158 = vpop.xlane.xlu0 %157
    %159 = vadd.xlane.f32.xlu0 %v110
    %v160 = vpop.xlane.xlu0 %159
    %161 = vadd.xlane.f32.xlu0 %v111
    %v162 = vpop.xlane.xlu0 %161
    %163 = vadd.xlane.f32.xlu0 %v112
    %v164 = vpop.xlane.xlu0 %163
    %165 = vadd.xlane.f32.xlu0 %v113
    %v166 = vpop.xlane.xlu0 %165
    %167 = vadd.xlane.f32.xlu0 %v114
    %v168 = vpop.xlane.xlu0 %167
    %169 = vadd.xlane.f32.xlu0 %v115
    %v170 = vpop.xlane.xlu0 %169
    %171 = vadd.xlane.f32.xlu0 %v116
    %v172 = vpop.xlane.xlu0 %171
    %173 = vadd.xlane.f32.xlu0 %v117
    %v174 = vpop.xlane.xlu0 %173
    %175 = vadd.xlane.f32.xlu0 %v118
    %v176 = vpop.xlane.xlu0 %175
    %177 = vadd.xlane.f32.xlu0 %v119
    %v178 = vpop.xlane.xlu0 %177
    %179 = vadd.xlane.f32.xlu0 %v120
    %v180 = vpop.xlane.xlu0 %179
    %181 = vadd.xlane.f32.xlu0 %v121
    %v182 = vpop.xlane.xlu0 %181
    %183 = vadd.xlane.f32.xlu0 %v122
    %v184 = vpop.xlane.xlu0 %183
    %185 = vadd.xlane.f32.xlu0 %v123
    %v186 = vpop.xlane.xlu0 %185
    %187 = vadd.xlane.f32.xlu0 %v124
    %v188 = vpop.xlane.xlu0 %187
    %v189 = vmax.f32 %v126, 1e-24
    %v190 = vmax.f32 %v128, 1e-24
    %v191 = vmax.f32 %v130, 1e-24
    %v192 = vmax.f32 %v132, 1e-24
    %v193 = vmax.f32 %v134, 1e-24
    %v194 = vmax.f32 %v136, 1e-24
    %v195 = vmax.f32 %v138, 1e-24
    %v196 = vmax.f32 %v140, 1e-24
    %v197 = vmax.f32 %v142, 1e-24
    %v198 = vmax.f32 %v144, 1e-24
    %v199 = vmax.f32 %v146, 1e-24
    %v200 = vmax.f32 %v148, 1e-24
    %v201 = vmax.f32 %v150, 1e-24
    %v202 = vmax.f32 %v152, 1e-24
    %v203 = vmax.f32 %v154, 1e-24
    %v204 = vmax.f32 %v156, 1e-24
    %v205 = vmax.f32 %v158, 1e-24
    %v206 = vmax.f32 %v160, 1e-24
    %v207 = vmax.f32 %v162, 1e-24
    %v208 = vmax.f32 %v164, 1e-24
    %v209 = vmax.f32 %v166, 1e-24
    %v210 = vmax.f32 %v168, 1e-24
    %v211 = vmax.f32 %v170, 1e-24
    %v212 = vmax.f32 %v172, 1e-24
    %v213 = vmax.f32 %v174, 1e-24
    %v214 = vmax.f32 %v176, 1e-24
    %v215 = vmax.f32 %v178, 1e-24
    %v216 = vmax.f32 %v180, 1e-24
    %v217 = vmax.f32 %v182, 1e-24
    %v218 = vmax.f32 %v184, 1e-24
    %v219 = vmax.f32 %v186, 1e-24
    %v220 = vmax.f32 %v188, 1e-24
    %v221 = vrsqrt.pop %v189
    %v222 = vmul.f32 %v221, %v189
    %v223 = vmul.f32 %v222, %v221
    %v224 = vmul.f32 0.5, %v223
    %v225 = vsub.f32 1.5, %v224
    %v226 = vmul.f32 %v221, %v225
    %vm227 = vweird.f32 %v189
    %vm228 = vweird.f32 %v221
    %vm229 = vmor %vm227, %vm228
    %v230 = vsel %vm229, %v221, %v226
    %v231 = vrsqrt.pop %v190
    %v232 = vmul.f32 %v231, %v190
    %v233 = vmul.f32 %v232, %v231
    %v234 = vmul.f32 0.5, %v233
    %v235 = vsub.f32 1.5, %v234
    %v236 = vmul.f32 %v231, %v235
    %vm237 = vweird.f32 %v190
    %vm238 = vweird.f32 %v231
    %vm239 = vmor %vm237, %vm238
    %v240 = vsel %vm239, %v231, %v236
    %v241 = vrsqrt.pop %v191
    %v242 = vmul.f32 %v241, %v191
    %v243 = vmul.f32 %v242, %v241
    %v244 = vmul.f32 0.5, %v243
    %v245 = vsub.f32 1.5, %v244
    %v246 = vmul.f32 %v241, %v245
    %vm247 = vweird.f32 %v191
    %vm248 = vweird.f32 %v241
    %vm249 = vmor %vm247, %vm248
    %v250 = vsel %vm249, %v241, %v246
    %v251 = vrsqrt.pop %v192
    %v252 = vmul.f32 %v251, %v192
    %v253 = vmul.f32 %v252, %v251
    %v254 = vmul.f32 0.5, %v253
    %v255 = vsub.f32 1.5, %v254
    %v256 = vmul.f32 %v251, %v255
    %vm257 = vweird.f32 %v192
    %vm258 = vweird.f32 %v251
    %vm259 = vmor %vm257, %vm258
    %v260 = vsel %vm259, %v251, %v256
    %v261 = vrsqrt.pop %v193
    %v262 = vmul.f32 %v261, %v193
    %v263 = vmul.f32 %v262, %v261
    %v264 = vmul.f32 0.5, %v263
    %v265 = vsub.f32 1.5, %v264
    %v266 = vmul.f32 %v261, %v265
    %vm267 = vweird.f32 %v193
    %vm268 = vweird.f32 %v261
    %vm269 = vmor %vm267, %vm268
    %v270 = vsel %vm269, %v261, %v266
    %v271 = vrsqrt.pop %v194
    %v272 = vmul.f32 %v271, %v194
    %v273 = vmul.f32 %v272, %v271
    %v274 = vmul.f32 0.5, %v273
    %v275 = vsub.f32 1.5, %v274
    %v276 = vmul.f32 %v271, %v275
    %vm277 = vweird.f32 %v194
    %vm278 = vweird.f32 %v271
    %vm279 = vmor %vm277, %vm278
    %v280 = vsel %vm279, %v271, %v276
    %v281 = vrsqrt.pop %v195
    %v282 = vmul.f32 %v281, %v195
    %v283 = vmul.f32 %v282, %v281
    %v284 = vmul.f32 0.5, %v283
    %v285 = vsub.f32 1.5, %v284
    %v286 = vmul.f32 %v281, %v285
    %vm287 = vweird.f32 %v195
    %vm288 = vweird.f32 %v281
    %vm289 = vmor %vm287, %vm288
    %v290 = vsel %vm289, %v281, %v286
    %v291 = vrsqrt.pop %v196
    %v292 = vmul.f32 %v291, %v196
    %v293 = vmul.f32 %v292, %v291
    %v294 = vmul.f32 0.5, %v293
    %v295 = vsub.f32 1.5, %v294
    %v296 = vmul.f32 %v291, %v295
    %vm297 = vweird.f32 %v196
    %vm298 = vweird.f32 %v291
    %vm299 = vmor %vm297, %vm298
    %v300 = vsel %vm299, %v291, %v296
    %v301 = vrsqrt.pop %v197
    %v302 = vmul.f32 %v301, %v197
    %v303 = vmul.f32 %v302, %v301
    %v304 = vmul.f32 0.5, %v303
    %v305 = vsub.f32 1.5, %v304
    %v306 = vmul.f32 %v301, %v305
    %vm307 = vweird.f32 %v197
    %vm308 = vweird.f32 %v301
    %vm309 = vmor %vm307, %vm308
    %v310 = vsel %vm309, %v301, %v306
    %v311 = vrsqrt.pop %v198
    %v312 = vmul.f32 %v311, %v198
    %v313 = vmul.f32 %v312, %v311
    %v314 = vmul.f32 0.5, %v313
    %v315 = vsub.f32 1.5, %v314
    %v316 = vmul.f32 %v311, %v315
    %vm317 = vweird.f32 %v198
    %vm318 = vweird.f32 %v311
    %vm319 = vmor %vm317, %vm318
    %v320 = vsel %vm319, %v311, %v316
    %v321 = vrsqrt.pop %v199
    %v322 = vmul.f32 %v321, %v199
    %v323 = vmul.f32 %v322, %v321
    %v324 = vmul.f32 0.5, %v323
    %v325 = vsub.f32 1.5, %v324
    %v326 = vmul.f32 %v321, %v325
    %vm327 = vweird.f32 %v199
    %vm328 = vweird.f32 %v321
    %vm329 = vmor %vm327, %vm328
    %v330 = vsel %vm329, %v321, %v326
    %v331 = vrsqrt.pop %v200
    %v332 = vmul.f32 %v331, %v200
    %v333 = vmul.f32 %v332, %v331
    %v334 = vmul.f32 0.5, %v333
    %v335 = vsub.f32 1.5, %v334
    %v336 = vmul.f32 %v331, %v335
    %vm337 = vweird.f32 %v200
    %vm338 = vweird.f32 %v331
    %vm339 = vmor %vm337, %vm338
    %v340 = vsel %vm339, %v331, %v336
    %v341 = vrsqrt.pop %v201
    %v342 = vmul.f32 %v341, %v201
    %v343 = vmul.f32 %v342, %v341
    %v344 = vmul.f32 0.5, %v343
    %v345 = vsub.f32 1.5, %v344
    %v346 = vmul.f32 %v341, %v345
    %vm347 = vweird.f32 %v201
    %vm348 = vweird.f32 %v341
    %vm349 = vmor %vm347, %vm348
    %v350 = vsel %vm349, %v341, %v346
    %v351 = vrsqrt.pop %v202
    %v352 = vmul.f32 %v351, %v202
    %v353 = vmul.f32 %v352, %v351
    %v354 = vmul.f32 0.5, %v353
    %v355 = vsub.f32 1.5, %v354
    %v356 = vmul.f32 %v351, %v355
    %vm357 = vweird.f32 %v202
    %vm358 = vweird.f32 %v351
    %vm359 = vmor %vm357, %vm358
    %v360 = vsel %vm359, %v351, %v356
    %v361 = vrsqrt.pop %v203
    %v362 = vmul.f32 %v361, %v203
    %v363 = vmul.f32 %v362, %v361
    %v364 = vmul.f32 0.5, %v363
    %v365 = vsub.f32 1.5, %v364
    %v366 = vmul.f32 %v361, %v365
    %vm367 = vweird.f32 %v203
    %vm368 = vweird.f32 %v361
    %vm369 = vmor %vm367, %vm368
    %v370 = vsel %vm369, %v361, %v366
    %v371 = vrsqrt.pop %v204
    %v372 = vmul.f32 %v371, %v204
    %v373 = vmul.f32 %v372, %v371
    %v374 = vmul.f32 0.5, %v373
    %v375 = vsub.f32 1.5, %v374
    %v376 = vmul.f32 %v371, %v375
    %vm377 = vweird.f32 %v204
    %vm378 = vweird.f32 %v371
    %vm379 = vmor %vm377, %vm378
    %v380 = vsel %vm379, %v371, %v376
    %v381 = vrsqrt.pop %v205
    %v382 = vmul.f32 %v381, %v205
    %v383 = vmul.f32 %v382, %v381
    %v384 = vmul.f32 0.5, %v383
    %v385 = vsub.f32 1.5, %v384
    %v386 = vmul.f32 %v381, %v385
    %vm387 = vweird.f32 %v205
    %vm388 = vweird.f32 %v381
    %vm389 = vmor %vm387, %vm388
    %v390 = vsel %vm389, %v381, %v386
    %v391 = vrsqrt.pop %v206
    %v392 = vmul.f32 %v391, %v206
    %v393 = vmul.f32 %v392, %v391
    %v394 = vmul.f32 0.5, %v393
    %v395 = vsub.f32 1.5, %v394
    %v396 = vmul.f32 %v391, %v395
    %vm397 = vweird.f32 %v206
    %vm398 = vweird.f32 %v391
    %vm399 = vmor %vm397, %vm398
    %v400 = vsel %vm399, %v391, %v396
    %v401 = vrsqrt.pop %v207
    %v402 = vmul.f32 %v401, %v207
    %v403 = vmul.f32 %v402, %v401
    %v404 = vmul.f32 0.5, %v403
    %v405 = vsub.f32 1.5, %v404
    %v406 = vmul.f32 %v401, %v405
    %vm407 = vweird.f32 %v207
    %vm408 = vweird.f32 %v401
    %vm409 = vmor %vm407, %vm408
    %v410 = vsel %vm409, %v401, %v406
    %v411 = vrsqrt.pop %v208
    %v412 = vmul.f32 %v411, %v208
    %v413 = vmul.f32 %v412, %v411
    %v414 = vmul.f32 0.5, %v413
    %v415 = vsub.f32 1.5, %v414
    %v416 = vmul.f32 %v411, %v415
    %vm417 = vweird.f32 %v208
    %vm418 = vweird.f32 %v411
    %vm419 = vmor %vm417, %vm418
    %v420 = vsel %vm419, %v411, %v416
    %v421 = vrsqrt.pop %v209
    %v422 = vmul.f32 %v421, %v209
    %v423 = vmul.f32 %v422, %v421
    %v424 = vmul.f32 0.5, %v423
    %v425 = vsub.f32 1.5, %v424
    %v426 = vmul.f32 %v421, %v425
    %vm427 = vweird.f32 %v209
    %vm428 = vweird.f32 %v421
    %vm429 = vmor %vm427, %vm428
    %v430 = vsel %vm429, %v421, %v426
    %v431 = vrsqrt.pop %v210
    %v432 = vmul.f32 %v431, %v210
    %v433 = vmul.f32 %v432, %v431
    %v434 = vmul.f32 0.5, %v433
    %v435 = vsub.f32 1.5, %v434
    %v436 = vmul.f32 %v431, %v435
    %vm437 = vweird.f32 %v210
    %vm438 = vweird.f32 %v431
    %vm439 = vmor %vm437, %vm438
    %v440 = vsel %vm439, %v431, %v436
    %v441 = vrsqrt.pop %v211
    %v442 = vmul.f32 %v441, %v211
    %v443 = vmul.f32 %v442, %v441
    %v444 = vmul.f32 0.5, %v443
    %v445 = vsub.f32 1.5, %v444
    %v446 = vmul.f32 %v441, %v445
    %vm447 = vweird.f32 %v211
    %vm448 = vweird.f32 %v441
    %vm449 = vmor %vm447, %vm448
    %v450 = vsel %vm449, %v441, %v446
    %v451 = vrsqrt.pop %v212
    %v452 = vmul.f32 %v451, %v212
    %v453 = vmul.f32 %v452, %v451
    %v454 = vmul.f32 0.5, %v453
    %v455 = vsub.f32 1.5, %v454
    %v456 = vmul.f32 %v451, %v455
    %vm457 = vweird.f32 %v212
    %vm458 = vweird.f32 %v451
    %vm459 = vmor %vm457, %vm458
    %v460 = vsel %vm459, %v451, %v456
    %v461 = vrsqrt.pop %v213
    %v462 = vmul.f32 %v461, %v213
    %v463 = vmul.f32 %v462, %v461
    %v464 = vmul.f32 0.5, %v463
    %v465 = vsub.f32 1.5, %v464
    %v466 = vmul.f32 %v461, %v465
    %vm467 = vweird.f32 %v213
    %vm468 = vweird.f32 %v461
    %vm469 = vmor %vm467, %vm468
    %v470 = vsel %vm469, %v461, %v466
    %v471 = vrsqrt.pop %v214
    %v472 = vmul.f32 %v471, %v214
    %v473 = vmul.f32 %v472, %v471
    %v474 = vmul.f32 0.5, %v473
    %v475 = vsub.f32 1.5, %v474
    %v476 = vmul.f32 %v471, %v475
    %vm477 = vweird.f32 %v214
    %vm478 = vweird.f32 %v471
    %vm479 = vmor %vm477, %vm478
    %v480 = vsel %vm479, %v471, %v476
    %v481 = vrsqrt.pop %v215
    %v482 = vmul.f32 %v481, %v215
    %v483 = vmul.f32 %v482, %v481
    %v484 = vmul.f32 0.5, %v483
    %v485 = vsub.f32 1.5, %v484
    %v486 = vmul.f32 %v481, %v485
    %vm487 = vweird.f32 %v215
    %vm488 = vweird.f32 %v481
    %vm489 = vmor %vm487, %vm488
    %v490 = vsel %vm489, %v481, %v486
    %v491 = vrsqrt.pop %v216
    %v492 = vmul.f32 %v491, %v216
    %v493 = vmul.f32 %v492, %v491
    %v494 = vmul.f32 0.5, %v493
    %v495 = vsub.f32 1.5, %v494
    %v496 = vmul.f32 %v491, %v495
    %vm497 = vweird.f32 %v216
    %vm498 = vweird.f32 %v491
    %vm499 = vmor %vm497, %vm498
    %v500 = vsel %vm499, %v491, %v496
    %v501 = vrsqrt.pop %v217
    %v502 = vmul.f32 %v501, %v217
    %v503 = vmul.f32 %v502, %v501
    %v504 = vmul.f32 0.5, %v503
    %v505 = vsub.f32 1.5, %v504
    %v506 = vmul.f32 %v501, %v505
    %vm507 = vweird.f32 %v217
    %vm508 = vweird.f32 %v501
    %vm509 = vmor %vm507, %vm508
    %v510 = vsel %vm509, %v501, %v506
    %v511 = vrsqrt.pop %v218
    %v512 = vmul.f32 %v511, %v218
    %v513 = vmul.f32 %v512, %v511
    %v514 = vmul.f32 0.5, %v513
    %v515 = vsub.f32 1.5, %v514
    %v516 = vmul.f32 %v511, %v515
    %vm517 = vweird.f32 %v218
    %vm518 = vweird.f32 %v511
    %vm519 = vmor %vm517, %vm518
    %v520 = vsel %vm519, %v511, %v516
    %v521 = vrsqrt.pop %v219
    %v522 = vmul.f32 %v521, %v219
    %v523 = vmul.f32 %v522, %v521
    %v524 = vmul.f32 0.5, %v523
    %v525 = vsub.f32 1.5, %v524
    %v526 = vmul.f32 %v521, %v525
    %vm527 = vweird.f32 %v219
    %vm528 = vweird.f32 %v521
    %vm529 = vmor %vm527, %vm528
    %v530 = vsel %vm529, %v521, %v526
    %v531 = vrsqrt.pop %v220
    %v532 = vmul.f32 %v531, %v220
    %v533 = vmul.f32 %v532, %v531
    %v534 = vmul.f32 0.5, %v533
    %v535 = vsub.f32 1.5, %v534
    %v536 = vmul.f32 %v531, %v535
    %vm537 = vweird.f32 %v220
    %vm538 = vweird.f32 %v531
    %vm539 = vmor %vm537, %vm538
    %v540 = vsel %vm539, %v531, %v536
    %v541 = vmul.f32 %v61, %v230
    %v542 = vmul.f32 %v62, %v240
    %v543 = vmul.f32 %v63, %v250
    %v544 = vmul.f32 %v64, %v260
    %v545 = vmul.f32 %v65, %v270
    %v546 = vmul.f32 %v66, %v280
    %v547 = vmul.f32 %v67, %v290
    %v548 = vmul.f32 %v68, %v300
    %v549 = vmul.f32 %v69, %v310
    %v550 = vmul.f32 %v70, %v320
    %v551 = vmul.f32 %v71, %v330
    %v552 = vmul.f32 %v72, %v340
    %v553 = vmul.f32 %v73, %v350
    %v554 = vmul.f32 %v74, %v360
    %v555 = vmul.f32 %v75, %v370
    %v556 = vmul.f32 %v76, %v380
    %v557 = vmul.f32 %v77, %v390
    %v558 = vmul.f32 %v78, %v400
    %v559 = vmul.f32 %v79, %v410
    %v560 = vmul.f32 %v80, %v420
    %v561 = vmul.f32 %v81, %v430
    %v562 = vmul.f32 %v82, %v440
    %v563 = vmul.f32 %v83, %v450
    %v564 = vmul.f32 %v84, %v460
    %v565 = vmul.f32 %v85, %v470
    %v566 = vmul.f32 %v86, %v480
    %v567 = vmul.f32 %v87, %v490
    %v568 = vmul.f32 %v88, %v500
    %v569 = vmul.f32 %v89, %v510
    %v570 = vmul.f32 %v90, %v520
    %v571 = vmul.f32 %v91, %v530
    %v572 = vmul.f32 %v92, %v540
    %v573 = vpack.c.bf16 %v542, %v541
    %v574 = vpack.c.bf16 %v544, %v543
    %v575 = vpack.c.bf16 %v546, %v545
    %v576 = vpack.c.bf16 %v548, %v547
    %v577 = vpack.c.bf16 %v550, %v549
    %v578 = vpack.c.bf16 %v552, %v551
    %v579 = vpack.c.bf16 %v554, %v553
    %v580 = vpack.c.bf16 %v556, %v555
    %v581 = vpack.c.bf16 %v558, %v557
    %v582 = vpack.c.bf16 %v560, %v559
    %v583 = vpack.c.bf16 %v562, %v561
    %v584 = vpack.c.bf16 %v564, %v563
    %v585 = vpack.c.bf16 %v566, %v565
    %v586 = vpack.c.bf16 %v568, %v567
    %v587 = vpack.c.bf16 %v570, %v569
    %v588 = vpack.c.bf16 %v572, %v571
    %v589 = vld [vmem:[%s1] sm:$0xf]
    %v590 = vld [vmem:[%s1 + $0x4] sm:$0xf]
    %v591 = vld [vmem:[%s1 + $0x8] sm:$0xf]
    %v592 = vld [vmem:[%s1 + $0xc] sm:$0xf]
    %v593 = vld [vmem:[%s1 + $0x10] sm:$0xf]
    %v594 = vld [vmem:[%s1 + $0x14] sm:$0xf]
    %v595 = vld [vmem:[%s1 + $0x18] sm:$0xf]
    %v596 = vld [vmem:[%s1 + $0x1c] sm:$0xf]
    %v597 = vld [vmem:[%s1 + $0x20] sm:$0xf]
    %v598 = vld [vmem:[%s1 + $0x24] sm:$0xf]
    %v599 = vld [vmem:[%s1 + $0x28] sm:$0xf]
    %v600 = vld [vmem:[%s1 + $0x2c] sm:$0xf]
    %v601 = vld [vmem:[%s1 + $0x30] sm:$0xf]
    %v602 = vld [vmem:[%s1 + $0x34] sm:$0xf]
    %v603 = vld [vmem:[%s1 + $0x38] sm:$0xf]
    %v604 = vld [vmem:[%s1 + $0x3c] sm:$0xf]
    %v605 = vld [vmem:[#allocation5] sm:$0x1]
    %v607 = vperm.slane %v605, 0
    %v625 = vunpack.c.l.b16 %v589
    %v626 = vunpack.c.l.b16 %v590
    %v627 = vunpack.c.l.b16 %v591
    %v628 = vunpack.c.l.b16 %v592
    %v629 = vunpack.c.l.b16 %v593
    %v630 = vunpack.c.l.b16 %v594
    %v631 = vunpack.c.l.b16 %v595
    %v632 = vunpack.c.l.b16 %v596
    %v633 = vunpack.c.l.b16 %v597
    %v634 = vunpack.c.l.b16 %v598
    %v635 = vunpack.c.l.b16 %v599
    %v636 = vunpack.c.l.b16 %v600
    %v637 = vunpack.c.l.b16 %v601
    %v638 = vunpack.c.l.b16 %v602
    %v639 = vunpack.c.l.b16 %v603
    %v640 = vunpack.c.l.b16 %v604
    %v641 = vpack.c.b16 %v626, %v625
    %v642 = vpack.c.b16 %v628, %v627
    %v643 = vpack.c.b16 %v630, %v629
    %v644 = vpack.c.b16 %v632, %v631
    %v645 = vpack.c.b16 %v634, %v633
    %v646 = vpack.c.b16 %v636, %v635
    %v647 = vpack.c.b16 %v638, %v637
    %v648 = vpack.c.b16 %v640, %v639
    %657 = vmatpush.bf16.msra.mxu0 %v648
    %658 = vmatpush.bf16.msra.mxu0 %v647
    %659 = vmatpush.bf16.msra.mxu0 %v646
    %660 = vmatpush.bf16.msra.mxu0 %v645
    %661 = vmatpush.bf16.msra.mxu0 %v644
    %662 = vmatpush.bf16.msra.mxu0 %v643
    %663 = vmatpush.bf16.msra.mxu0 %v642
    %664 = vmatpush.bf16.msra.mxu0 %v641
    %665 = vmatmul.bf16.gmra.mxu0 %v573
    %v666 = vpop.f32.mrf.mxu0
    %v667 = vadd.f32 %v607, %v666
    %v668 = vpop.f32.mrf.mxu0
    %v669 = vadd.f32 %v607, %v668
    %670 = vmatmul.bf16.gmra.mxu0 %v574
    %v671 = vpop.f32.mrf.mxu0
    %v672 = vadd.f32 %v607, %v671
    %v673 = vpop.f32.mrf.mxu0
    %v674 = vadd.f32 %v607, %v673
    %675 = vmatmul.bf16.gmra.mxu0 %v575
    %v676 = vpop.f32.mrf.mxu0
    %v677 = vadd.f32 %v607, %v676
    %v678 = vpop.f32.mrf.mxu0
    %v679 = vadd.f32 %v607, %v678
    %680 = vmatmul.bf16.gmra.mxu0 %v576
    %v681 = vpop.f32.mrf.mxu0
    %v682 = vadd.f32 %v607, %v681
    %v683 = vpop.f32.mrf.mxu0
    %v684 = vadd.f32 %v607, %v683
    %685 = vmatmul.bf16.gmra.mxu0 %v577
    %v686 = vpop.f32.mrf.mxu0
    %v687 = vadd.f32 %v607, %v686
    %v688 = vpop.f32.mrf.mxu0
    %v689 = vadd.f32 %v607, %v688
    %690 = vmatmul.bf16.gmra.mxu0 %v578
    %v691 = vpop.f32.mrf.mxu0
    %v692 = vadd.f32 %v607, %v691
    %v693 = vpop.f32.mrf.mxu0
    %v694 = vadd.f32 %v607, %v693
    %695 = vmatmul.bf16.gmra.mxu0 %v579
    %v696 = vpop.f32.mrf.mxu0
    %v697 = vadd.f32 %v607, %v696
    %v698 = vpop.f32.mrf.mxu0
    %v699 = vadd.f32 %v607, %v698
    %700 = vmatmul.bf16.gmra.mxu0 %v580
    %v701 = vpop.f32.mrf.mxu0
    %v702 = vadd.f32 %v607, %v701
    %v703 = vpop.f32.mrf.mxu0
    %v704 = vadd.f32 %v607, %v703
    %705 = vmatmul.bf16.gmra.mxu0 %v581
    %v706 = vpop.f32.mrf.mxu0
    %v707 = vadd.f32 %v607, %v706
    %v708 = vpop.f32.mrf.mxu0
    %v709 = vadd.f32 %v607, %v708
    %710 = vmatmul.bf16.gmra.mxu0 %v582
    %v711 = vpop.f32.mrf.mxu0
    %v712 = vadd.f32 %v607, %v711
    %v713 = vpop.f32.mrf.mxu0
    %v714 = vadd.f32 %v607, %v713
    %715 = vmatmul.bf16.gmra.mxu0 %v583
    %v716 = vpop.f32.mrf.mxu0
    %v717 = vadd.f32 %v607, %v716
    %v718 = vpop.f32.mrf.mxu0
    %v719 = vadd.f32 %v607, %v718
    %720 = vmatmul.bf16.gmra.mxu0 %v584
    %v721 = vpop.f32.mrf.mxu0
    %v722 = vadd.f32 %v607, %v721
    %v723 = vpop.f32.mrf.mxu0
    %v724 = vadd.f32 %v607, %v723
    %725 = vmatmul.bf16.gmra.mxu0 %v585
    %v726 = vpop.f32.mrf.mxu0
    %v727 = vadd.f32 %v607, %v726
    %v728 = vpop.f32.mrf.mxu0
    %v729 = vadd.f32 %v607, %v728
    %730 = vmatmul.bf16.gmra.mxu0 %v586
    %v731 = vpop.f32.mrf.mxu0
    %v732 = vadd.f32 %v607, %v731
    %v733 = vpop.f32.mrf.mxu0
    %v734 = vadd.f32 %v607, %v733
    %735 = vmatmul.bf16.gmra.mxu0 %v587
    %v736 = vpop.f32.mrf.mxu0
    %v737 = vadd.f32 %v607, %v736
    %v738 = vpop.f32.mrf.mxu0
    %v739 = vadd.f32 %v607, %v738
    %740 = vmatmul.bf16.gmra.mxu0 %v588
    %v741 = vpop.f32.mrf.mxu0
    %v742 = vadd.f32 %v607, %v741
    %v743 = vpop.f32.mrf.mxu0
    %v744 = vadd.f32 %v607, %v743
    %745 = vdwg.mxu0
    %v746 = vtanh.pop %v667
    %v747 = vtanh.pop %v669
    %v748 = vtanh.pop %v672
    %v749 = vtanh.pop %v674
    %v750 = vtanh.pop %v677
    %v751 = vtanh.pop %v679
    %v752 = vtanh.pop %v682
    %v753 = vtanh.pop %v684
    %v754 = vtanh.pop %v687
    %v755 = vtanh.pop %v689
    %v756 = vtanh.pop %v692
    %v757 = vtanh.pop %v694
    %v758 = vtanh.pop %v697
    %v759 = vtanh.pop %v699
    %v760 = vtanh.pop %v702
    %v761 = vtanh.pop %v704
    %v762 = vtanh.pop %v707
    %v763 = vtanh.pop %v709
    %v764 = vtanh.pop %v712
    %v765 = vtanh.pop %v714
    %v766 = vtanh.pop %v717
    %v767 = vtanh.pop %v719
    %v768 = vtanh.pop %v722
    %v769 = vtanh.pop %v724
    %v770 = vtanh.pop %v727
    %v771 = vtanh.pop %v729
    %v772 = vtanh.pop %v732
    %v773 = vtanh.pop %v734
    %v774 = vtanh.pop %v737
    %v775 = vtanh.pop %v739
    %v776 = vtanh.pop %v742
    %v777 = vtanh.pop %v744
    %v778 = vpack.c.bf16 %v747, %v746
    %v779 = vpack.c.bf16 %v749, %v748
    %v780 = vpack.c.bf16 %v751, %v750
    %v781 = vpack.c.bf16 %v753, %v752
    %v782 = vpack.c.bf16 %v755, %v754
    %v783 = vpack.c.bf16 %v757, %v756
    %v784 = vpack.c.bf16 %v759, %v758
    %v785 = vpack.c.bf16 %v761, %v760
    %v786 = vpack.c.bf16 %v763, %v762
    %v787 = vpack.c.bf16 %v765, %v764
    %v788 = vpack.c.bf16 %v767, %v766
    %v789 = vpack.c.bf16 %v769, %v768
    %v790 = vpack.c.bf16 %v771, %v770
    %v791 = vpack.c.bf16 %v773, %v772
    %v792 = vpack.c.bf16 %v775, %v774
    %v793 = vpack.c.bf16 %v777, %v776
    %v794 = vld [vmem:[%s3] sm:$0xff]
    %v795 = vld [vmem:[%s3 + $0x8] sm:$0xff]
    %v796 = vld [vmem:[%s3 + $0x10] sm:$0xff]
    %v797 = vld [vmem:[%s3 + $0x18] sm:$0xff]
    %v798 = vld [vmem:[%s3 + $0x20] sm:$0xff]
    %v799 = vld [vmem:[%s3 + $0x28] sm:$0xff]
    %v800 = vld [vmem:[%s3 + $0x30] sm:$0xff]
    %v801 = vld [vmem:[%s3 + $0x38] sm:$0xff]
    %v802 = vld [vmem:[%s4] sm:$0x3]
    %v804 = vperm.slane %v802, 0
    %v805 = vperm.slane %v802, 1
    %v816 = vunpack.c.l.b16 %v794
    %v817 = vunpack.c.h.b16 %v794
    %v818 = vunpack.c.l.b16 %v795
    %v819 = vunpack.c.h.b16 %v795
    %v820 = vunpack.c.l.b16 %v796
    %v821 = vunpack.c.h.b16 %v796
    %v822 = vunpack.c.l.b16 %v797
    %v823 = vunpack.c.h.b16 %v797
    %v824 = vunpack.c.l.b16 %v798
    %v825 = vunpack.c.h.b16 %v798
    %v826 = vunpack.c.l.b16 %v799
    %v827 = vunpack.c.h.b16 %v799
    %v828 = vunpack.c.l.b16 %v800
    %v829 = vunpack.c.h.b16 %v800
    %v830 = vunpack.c.l.b16 %v801
    %v831 = vunpack.c.h.b16 %v801
    %v832 = vpack.c.b16 %v818, %v816
    %v833 = vpack.c.b16 %v819, %v817
    %v834 = vpack.c.b16 %v822, %v820
    %v835 = vpack.c.b16 %v823, %v821
    %v836 = vpack.c.b16 %v826, %v824
    %v837 = vpack.c.b16 %v827, %v825
    %v838 = vpack.c.b16 %v830, %v828
    %v839 = vpack.c.b16 %v831, %v829
    %vm848 = vcmask 523264
    %v850 = vsel %vm848, %v778, 0
    %v853 = vsel %vm848, %v779, 0
    %v856 = vsel %vm848, %v780, 0
    %v859 = vsel %vm848, %v781, 0
    %v862 = vsel %vm848, %v782, 0
    %v865 = vsel %vm848, %v783, 0
    %v868 = vsel %vm848, %v784, 0
    %v871 = vsel %vm848, %v785, 0
    %v874 = vsel %vm848, %v786, 0
    %v877 = vsel %vm848, %v787, 0
    %v880 = vsel %vm848, %v788, 0
    %v883 = vsel %vm848, %v789, 0
    %v886 = vsel %vm848, %v790, 0
    %v889 = vsel %vm848, %v791, 0
    %v892 = vsel %vm848, %v792, 0
    %v895 = vsel %vm848, %v793, 0
    %897 = vmatpush.bf16.msra.mxu0 0
    %898 = vmatpush.bf16.msra.mxu0 0
    %899 = vmatpush.bf16.msra.mxu0 0
    %900 = vmatpush.bf16.msra.mxu0 0
    %901 = vmatpush.bf16.msra.mxu0 %v838
    %902 = vmatpush.bf16.msra.mxu0 %v836
    %903 = vmatpush.bf16.msra.mxu0 %v834
    %904 = vmatpush.bf16.msra.mxu0 %v832
    %905 = vmatmul.bf16.gmra.mxu0 %v850
    %v906 = vpop.f32.mrf.mxu0
    %v907 = vadd.f32 %v804, %v906
    %v908 = vpop.f32.mrf.mxu0
    %v909 = vadd.f32 %v804, %v908
    %910 = vmatmul.bf16.gmra.mxu0 %v853
    %v911 = vpop.f32.mrf.mxu0
    %v912 = vadd.f32 %v804, %v911
    %v913 = vpop.f32.mrf.mxu0
    %v914 = vadd.f32 %v804, %v913
    %915 = vmatmul.bf16.gmra.mxu0 %v856
    %v916 = vpop.f32.mrf.mxu0
    %v917 = vadd.f32 %v804, %v916
    %v918 = vpop.f32.mrf.mxu0
    %v919 = vadd.f32 %v804, %v918
    %920 = vmatmul.bf16.gmra.mxu0 %v859
    %v921 = vpop.f32.mrf.mxu0
    %v922 = vadd.f32 %v804, %v921
    %v923 = vpop.f32.mrf.mxu0
    %v924 = vadd.f32 %v804, %v923
    %925 = vmatmul.bf16.gmra.mxu0 %v862
    %v926 = vpop.f32.mrf.mxu0
    %v927 = vadd.f32 %v804, %v926
    %v928 = vpop.f32.mrf.mxu0
    %v929 = vadd.f32 %v804, %v928
    %930 = vmatmul.bf16.gmra.mxu0 %v865
    %v931 = vpop.f32.mrf.mxu0
    %v932 = vadd.f32 %v804, %v931
    %v933 = vpop.f32.mrf.mxu0
    %v934 = vadd.f32 %v804, %v933
    %935 = vmatmul.bf16.gmra.mxu0 %v868
    %v936 = vpop.f32.mrf.mxu0
    %v937 = vadd.f32 %v804, %v936
    %v938 = vpop.f32.mrf.mxu0
    %v939 = vadd.f32 %v804, %v938
    %940 = vmatmul.bf16.gmra.mxu0 %v871
    %v941 = vpop.f32.mrf.mxu0
    %v942 = vadd.f32 %v804, %v941
    %v943 = vpop.f32.mrf.mxu0
    %v944 = vadd.f32 %v804, %v943
    %945 = vmatmul.bf16.gmra.mxu0 %v874
    %v946 = vpop.f32.mrf.mxu0
    %v947 = vadd.f32 %v804, %v946
    %v948 = vpop.f32.mrf.mxu0
    %v949 = vadd.f32 %v804, %v948
    %950 = vmatmul.bf16.gmra.mxu0 %v877
    %v951 = vpop.f32.mrf.mxu0
    %v952 = vadd.f32 %v804, %v951
    %v953 = vpop.f32.mrf.mxu0
    %v954 = vadd.f32 %v804, %v953
    %955 = vmatmul.bf16.gmra.mxu0 %v880
    %v956 = vpop.f32.mrf.mxu0
    %v957 = vadd.f32 %v804, %v956
    %v958 = vpop.f32.mrf.mxu0
    %v959 = vadd.f32 %v804, %v958
    %960 = vmatmul.bf16.gmra.mxu0 %v883
    %v961 = vpop.f32.mrf.mxu0
    %v962 = vadd.f32 %v804, %v961
    %v963 = vpop.f32.mrf.mxu0
    %v964 = vadd.f32 %v804, %v963
    %965 = vmatmul.bf16.gmra.mxu0 %v886
    %v966 = vpop.f32.mrf.mxu0
    %v967 = vadd.f32 %v804, %v966
    %v968 = vpop.f32.mrf.mxu0
    %v969 = vadd.f32 %v804, %v968
    %970 = vmatmul.bf16.gmra.mxu0 %v889
    %v971 = vpop.f32.mrf.mxu0
    %v972 = vadd.f32 %v804, %v971
    %v973 = vpop.f32.mrf.mxu0
    %v974 = vadd.f32 %v804, %v973
    %975 = vmatmul.bf16.gmra.mxu0 %v892
    %v976 = vpop.f32.mrf.mxu0
    %v977 = vadd.f32 %v804, %v976
    %v978 = vpop.f32.mrf.mxu0
    %v979 = vadd.f32 %v804, %v978
    %980 = vmatmul.bf16.gmra.mxu0 %v895
    %v981 = vpop.f32.mrf.mxu0
    %v982 = vadd.f32 %v804, %v981
    %v983 = vpop.f32.mrf.mxu0
    %v984 = vadd.f32 %v804, %v983
    %985 = vdwg.mxu0
    %986 = vmatpush.bf16.msra.mxu0 0
    %987 = vmatpush.bf16.msra.mxu0 0
    %988 = vmatpush.bf16.msra.mxu0 0
    %989 = vmatpush.bf16.msra.mxu0 0
    %990 = vmatpush.bf16.msra.mxu0 %v839
    %991 = vmatpush.bf16.msra.mxu0 %v837
    %992 = vmatpush.bf16.msra.mxu0 %v835
    %993 = vmatpush.bf16.msra.mxu0 %v833
    %994 = vmatmul.bf16.gmra.mxu0 %v850
    %v995 = vpop.f32.mrf.mxu0
    %v996 = vadd.f32 %v805, %v995
    %v997 = vpop.f32.mrf.mxu0
    %v998 = vadd.f32 %v805, %v997
    %999 = vmatmul.bf16.gmra.mxu0 %v853
    %v1000 = vpop.f32.mrf.mxu0
    %v1001 = vadd.f32 %v805, %v1000
    %v1002 = vpop.f32.mrf.mxu0
    %v1003 = vadd.f32 %v805, %v1002
    %1004 = vmatmul.bf16.gmra.mxu0 %v856
    %v1005 = vpop.f32.mrf.mxu0
    %v1006 = vadd.f32 %v805, %v1005
    %v1007 = vpop.f32.mrf.mxu0
    %v1008 = vadd.f32 %v805, %v1007
    %1009 = vmatmul.bf16.gmra.mxu0 %v859
    %v1010 = vpop.f32.mrf.mxu0
    %v1011 = vadd.f32 %v805, %v1010
    %v1012 = vpop.f32.mrf.mxu0
    %v1013 = vadd.f32 %v805, %v1012
    %1014 = vmatmul.bf16.gmra.mxu0 %v862
    %v1015 = vpop.f32.mrf.mxu0
    %v1016 = vadd.f32 %v805, %v1015
    %v1017 = vpop.f32.mrf.mxu0
    %v1018 = vadd.f32 %v805, %v1017
    %1019 = vmatmul.bf16.gmra.mxu0 %v865
    %v1020 = vpop.f32.mrf.mxu0
    %v1021 = vadd.f32 %v805, %v1020
    %v1022 = vpop.f32.mrf.mxu0
    %v1023 = vadd.f32 %v805, %v1022
    %1024 = vmatmul.bf16.gmra.mxu0 %v868
    %v1025 = vpop.f32.mrf.mxu0
    %v1026 = vadd.f32 %v805, %v1025
    %v1027 = vpop.f32.mrf.mxu0
    %v1028 = vadd.f32 %v805, %v1027
    %1029 = vmatmul.bf16.gmra.mxu0 %v871
    %v1030 = vpop.f32.mrf.mxu0
    %v1031 = vadd.f32 %v805, %v1030
    %v1032 = vpop.f32.mrf.mxu0
    %v1033 = vadd.f32 %v805, %v1032
    %1034 = vmatmul.bf16.gmra.mxu0 %v874
    %v1035 = vpop.f32.mrf.mxu0
    %v1036 = vadd.f32 %v805, %v1035
    %v1037 = vpop.f32.mrf.mxu0
    %v1038 = vadd.f32 %v805, %v1037
    %1039 = vmatmul.bf16.gmra.mxu0 %v877
    %v1040 = vpop.f32.mrf.mxu0
    %v1041 = vadd.f32 %v805, %v1040
    %v1042 = vpop.f32.mrf.mxu0
    %v1043 = vadd.f32 %v805, %v1042
    %1044 = vmatmul.bf16.gmra.mxu0 %v880
    %v1045 = vpop.f32.mrf.mxu0
    %v1046 = vadd.f32 %v805, %v1045
    %v1047 = vpop.f32.mrf.mxu0
    %v1048 = vadd.f32 %v805, %v1047
    %1049 = vmatmul.bf16.gmra.mxu0 %v883
    %v1050 = vpop.f32.mrf.mxu0
    %v1051 = vadd.f32 %v805, %v1050
    %v1052 = vpop.f32.mrf.mxu0
    %v1053 = vadd.f32 %v805, %v1052
    %1054 = vmatmul.bf16.gmra.mxu0 %v886
    %v1055 = vpop.f32.mrf.mxu0
    %v1056 = vadd.f32 %v805, %v1055
    %v1057 = vpop.f32.mrf.mxu0
    %v1058 = vadd.f32 %v805, %v1057
    %1059 = vmatmul.bf16.gmra.mxu0 %v889
    %v1060 = vpop.f32.mrf.mxu0
    %v1061 = vadd.f32 %v805, %v1060
    %v1062 = vpop.f32.mrf.mxu0
    %v1063 = vadd.f32 %v805, %v1062
    %1064 = vmatmul.bf16.gmra.mxu0 %v892
    %v1065 = vpop.f32.mrf.mxu0
    %v1066 = vadd.f32 %v805, %v1065
    %v1067 = vpop.f32.mrf.mxu0
    %v1068 = vadd.f32 %v805, %v1067
    %1069 = vmatmul.bf16.gmra.mxu0 %v895
    %v1070 = vpop.f32.mrf.mxu0
    %v1071 = vadd.f32 %v805, %v1070
    %v1072 = vpop.f32.mrf.mxu0
    %v1073 = vadd.f32 %v805, %v1072
    %1074 = vdwg.mxu0
    %1075 = vst [vmem:[#allocation8] sm:$0xff] %v907
    %1076 = vst [vmem:[#allocation8 + $0x8] sm:$0xff] %v909
    %1077 = vst [vmem:[#allocation8 + $0x10] sm:$0xff] %v912
    %1078 = vst [vmem:[#allocation8 + $0x18] sm:$0xff] %v914
    %1079 = vst [vmem:[#allocation8 + $0x20] sm:$0xff] %v917
    %1080 = vst [vmem:[#allocation8 + $0x28] sm:$0xff] %v919
    %1081 = vst [vmem:[#allocation8 + $0x30] sm:$0xff] %v922
    %1082 = vst [vmem:[#allocation8 + $0x38] sm:$0xff] %v924
    %1083 = vst [vmem:[#allocation8 + $0x40] sm:$0xff] %v927
    %1084 = vst [vmem:[#allocation8 + $0x48] sm:$0xff] %v929
    %1085 = vst [vmem:[#allocation8 + $0x50] sm:$0xff] %v932
    %1086 = vst [vmem:[#allocation8 + $0x58] sm:$0xff] %v934
    %1087 = vst [vmem:[#allocation8 + $0x60] sm:$0xff] %v937
    %1088 = vst [vmem:[#allocation8 + $0x68] sm:$0xff] %v939
    %1089 = vst [vmem:[#allocation8 + $0x70] sm:$0xff] %v942
    %1090 = vst [vmem:[#allocation8 + $0x78] sm:$0xff] %v944
    %1091 = vst [vmem:[#allocation8 + $0x80] sm:$0xff] %v947
    %1092 = vst [vmem:[#allocation8 + $0x88] sm:$0xff] %v949
    %1093 = vst [vmem:[#allocation8 + $0x90] sm:$0xff] %v952
    %1094 = vst [vmem:[#allocation8 + $0x98] sm:$0xff] %v954
    %1095 = vst [vmem:[#allocation8 + $0xa0] sm:$0xff] %v957
    %1096 = vst [vmem:[#allocation8 + $0xa8] sm:$0xff] %v959
    %1097 = vst [vmem:[#allocation8 + $0xb0] sm:$0xff] %v962
    %1098 = vst [vmem:[#allocation8 + $0xb8] sm:$0xff] %v964
    %1099 = vst [vmem:[#allocation8 + $0xc0] sm:$0xff] %v967
    %1100 = vst [vmem:[#allocation8 + $0xc8] sm:$0xff] %v969
    %1101 = vst [vmem:[#allocation8 + $0xd0] sm:$0xff] %v972
    %1102 = vst [vmem:[#allocation8 + $0xd8] sm:$0xff] %v974
    %1103 = vst [vmem:[#allocation8 + $0xe0] sm:$0xff] %v977
    %1104 = vst [vmem:[#allocation8 + $0xe8] sm:$0xff] %v979
    %1105 = vst [vmem:[#allocation8 + $0xf0] sm:$0xff] %v982
    %1106 = vst [vmem:[#allocation8 + $0xf8] sm:$0xff] %v984
    %v1107 = vtanh.pop %v996
    %v1108 = vtanh.pop %v998
    %v1109 = vtanh.pop %v1001
    %v1110 = vtanh.pop %v1003
    %v1111 = vtanh.pop %v1006
    %v1112 = vtanh.pop %v1008
    %v1113 = vtanh.pop %v1011
    %v1114 = vtanh.pop %v1013
    %v1115 = vtanh.pop %v1016
    %v1116 = vtanh.pop %v1018
    %v1117 = vtanh.pop %v1021
    %v1118 = vtanh.pop %v1023
    %v1119 = vtanh.pop %v1026
    %v1120 = vtanh.pop %v1028
    %v1121 = vtanh.pop %v1031
    %v1122 = vtanh.pop %v1033
    %v1123 = vtanh.pop %v1036
    %v1124 = vtanh.pop %v1038
    %v1125 = vtanh.pop %v1041
    %v1126 = vtanh.pop %v1043
    %v1127 = vtanh.pop %v1046
    %v1128 = vtanh.pop %v1048
    %v1129 = vtanh.pop %v1051
    %v1130 = vtanh.pop %v1053
    %v1131 = vtanh.pop %v1056
    %v1132 = vtanh.pop %v1058
    %v1133 = vtanh.pop %v1061
    %v1134 = vtanh.pop %v1063
    %v1135 = vtanh.pop %v1066
    %v1136 = vtanh.pop %v1068
    %v1137 = vtanh.pop %v1071
    %v1138 = vtanh.pop %v1073
    %v1139 = vpack.c.bf16 %v1108, %v1107
    %v1140 = vpack.c.bf16 %v1110, %v1109
    %v1141 = vpack.c.bf16 %v1112, %v1111
    %v1142 = vpack.c.bf16 %v1114, %v1113
    %v1143 = vpack.c.bf16 %v1116, %v1115
    %v1144 = vpack.c.bf16 %v1118, %v1117
    %v1145 = vpack.c.bf16 %v1120, %v1119
    %v1146 = vpack.c.bf16 %v1122, %v1121
    %v1147 = vpack.c.bf16 %v1124, %v1123
    %v1148 = vpack.c.bf16 %v1126, %v1125
    %v1149 = vpack.c.bf16 %v1128, %v1127
    %v1150 = vpack.c.bf16 %v1130, %v1129
    %v1151 = vpack.c.bf16 %v1132, %v1131
    %v1152 = vpack.c.bf16 %v1134, %v1133
    %v1153 = vpack.c.bf16 %v1136, %v1135
    %v1154 = vpack.c.bf16 %v1138, %v1137
    %v1155 = vld [vmem:[%s5] sm:$0xf]
    %v1156 = vld [vmem:[%s5 + $0x4] sm:$0xf]
    %v1157 = vld [vmem:[%s5 + $0x8] sm:$0xf]
    %v1158 = vld [vmem:[%s5 + $0xc] sm:$0xf]
    %v1159 = vld [vmem:[%s5 + $0x10] sm:$0xf]
    %v1160 = vld [vmem:[%s5 + $0x14] sm:$0xf]
    %v1161 = vld [vmem:[%s5 + $0x18] sm:$0xf]
    %v1162 = vld [vmem:[%s5 + $0x1c] sm:$0xf]
    %v1163 = vld [vmem:[%s6] sm:$0x1]
    %v1165 = vperm.slane %v1163, 0
    %v1175 = vunpack.c.l.b16 %v1155
    %v1176 = vunpack.c.l.b16 %v1156
    %v1177 = vunpack.c.l.b16 %v1157
    %v1178 = vunpack.c.l.b16 %v1158
    %v1179 = vunpack.c.l.b16 %v1159
    %v1180 = vunpack.c.l.b16 %v1160
    %v1181 = vunpack.c.l.b16 %v1161
    %v1182 = vunpack.c.l.b16 %v1162
    %v1183 = vpack.c.b16 %v1176, %v1175
    %v1184 = vpack.c.b16 %v1178, %v1177
    %v1185 = vpack.c.b16 %v1180, %v1179
    %v1186 = vpack.c.b16 %v1182, %v1181
    %v1192 = vsel %vm848, %v1139, 0
    %v1195 = vsel %vm848, %v1140, 0
    %v1198 = vsel %vm848, %v1141, 0
    %v1201 = vsel %vm848, %v1142, 0
    %v1204 = vsel %vm848, %v1143, 0
    %v1207 = vsel %vm848, %v1144, 0
    %v1210 = vsel %vm848, %v1145, 0
    %v1213 = vsel %vm848, %v1146, 0
    %v1216 = vsel %vm848, %v1147, 0
    %v1219 = vsel %vm848, %v1148, 0
    %v1222 = vsel %vm848, %v1149, 0
    %v1225 = vsel %vm848, %v1150, 0
    %v1228 = vsel %vm848, %v1151, 0
    %v1231 = vsel %vm848, %v1152, 0
    %v1234 = vsel %vm848, %v1153, 0
    %v1237 = vsel %vm848, %v1154, 0
    %1239 = vmatpush.bf16.msra.mxu0 0
    %1240 = vmatpush.bf16.msra.mxu0 0
    %1241 = vmatpush.bf16.msra.mxu0 0
    %1242 = vmatpush.bf16.msra.mxu0 0
    %1243 = vmatpush.bf16.msra.mxu0 %v1186
    %1244 = vmatpush.bf16.msra.mxu0 %v1185
    %1245 = vmatpush.bf16.msra.mxu0 %v1184
    %1246 = vmatpush.bf16.msra.mxu0 %v1183
    %1247 = vmatmul.bf16.gmra.mxu0 %v1192
    %v1248 = vpop.f32.mrf.mxu0
    %v1249 = vadd.f32 %v1165, %v1248
    %v1250 = vpop.f32.mrf.mxu0
    %v1251 = vadd.f32 %v1165, %v1250
    %1252 = vmatmul.bf16.gmra.mxu0 %v1195
    %v1253 = vpop.f32.mrf.mxu0
    %v1254 = vadd.f32 %v1165, %v1253
    %v1255 = vpop.f32.mrf.mxu0
    %v1256 = vadd.f32 %v1165, %v1255
    %1257 = vmatmul.bf16.gmra.mxu0 %v1198
    %v1258 = vpop.f32.mrf.mxu0
    %v1259 = vadd.f32 %v1165, %v1258
    %v1260 = vpop.f32.mrf.mxu0
    %v1261 = vadd.f32 %v1165, %v1260
    %1262 = vmatmul.bf16.gmra.mxu0 %v1201
    %v1263 = vpop.f32.mrf.mxu0
    %v1264 = vadd.f32 %v1165, %v1263
    %v1265 = vpop.f32.mrf.mxu0
    %v1266 = vadd.f32 %v1165, %v1265
    %1267 = vmatmul.bf16.gmra.mxu0 %v1204
    %v1268 = vpop.f32.mrf.mxu0
    %v1269 = vadd.f32 %v1165, %v1268
    %v1270 = vpop.f32.mrf.mxu0
    %v1271 = vadd.f32 %v1165, %v1270
    %1272 = vmatmul.bf16.gmra.mxu0 %v1207
    %v1273 = vpop.f32.mrf.mxu0
    %v1274 = vadd.f32 %v1165, %v1273
    %v1275 = vpop.f32.mrf.mxu0
    %v1276 = vadd.f32 %v1165, %v1275
    %1277 = vmatmul.bf16.gmra.mxu0 %v1210
    %v1278 = vpop.f32.mrf.mxu0
    %v1279 = vadd.f32 %v1165, %v1278
    %v1280 = vpop.f32.mrf.mxu0
    %v1281 = vadd.f32 %v1165, %v1280
    %1282 = vmatmul.bf16.gmra.mxu0 %v1213
    %v1283 = vpop.f32.mrf.mxu0
    %v1284 = vadd.f32 %v1165, %v1283
    %v1285 = vpop.f32.mrf.mxu0
    %v1286 = vadd.f32 %v1165, %v1285
    %1287 = vmatmul.bf16.gmra.mxu0 %v1216
    %v1288 = vpop.f32.mrf.mxu0
    %v1289 = vadd.f32 %v1165, %v1288
    %v1290 = vpop.f32.mrf.mxu0
    %v1291 = vadd.f32 %v1165, %v1290
    %1292 = vmatmul.bf16.gmra.mxu0 %v1219
    %v1293 = vpop.f32.mrf.mxu0
    %v1294 = vadd.f32 %v1165, %v1293
    %v1295 = vpop.f32.mrf.mxu0
    %v1296 = vadd.f32 %v1165, %v1295
    %1297 = vmatmul.bf16.gmra.mxu0 %v1222
    %v1298 = vpop.f32.mrf.mxu0
    %v1299 = vadd.f32 %v1165, %v1298
    %v1300 = vpop.f32.mrf.mxu0
    %v1301 = vadd.f32 %v1165, %v1300
    %1302 = vmatmul.bf16.gmra.mxu0 %v1225
    %v1303 = vpop.f32.mrf.mxu0
    %v1304 = vadd.f32 %v1165, %v1303
    %v1305 = vpop.f32.mrf.mxu0
    %v1306 = vadd.f32 %v1165, %v1305
    %1307 = vmatmul.bf16.gmra.mxu0 %v1228
    %v1308 = vpop.f32.mrf.mxu0
    %v1309 = vadd.f32 %v1165, %v1308
    %v1310 = vpop.f32.mrf.mxu0
    %v1311 = vadd.f32 %v1165, %v1310
    %1312 = vmatmul.bf16.gmra.mxu0 %v1231
    %v1313 = vpop.f32.mrf.mxu0
    %v1314 = vadd.f32 %v1165, %v1313
    %v1315 = vpop.f32.mrf.mxu0
    %v1316 = vadd.f32 %v1165, %v1315
    %1317 = vmatmul.bf16.gmra.mxu0 %v1234
    %v1318 = vpop.f32.mrf.mxu0
    %v1319 = vadd.f32 %v1165, %v1318
    %v1320 = vpop.f32.mrf.mxu0
    %v1321 = vadd.f32 %v1165, %v1320
    %1322 = vmatmul.bf16.gmra.mxu0 %v1237
    %v1323 = vpop.f32.mrf.mxu0
    %v1324 = vadd.f32 %v1165, %v1323
    %v1325 = vpop.f32.mrf.mxu0
    %v1326 = vadd.f32 %v1165, %v1325
    %1327 = vdwg.mxu0
    %1328 = vst [vmem:[#allocation7] sm:$0xff] %v1249
    %1329 = vst [vmem:[#allocation7 + $0x8] sm:$0xff] %v1251
    %1330 = vst [vmem:[#allocation7 + $0x10] sm:$0xff] %v1254
    %1331 = vst [vmem:[#allocation7 + $0x18] sm:$0xff] %v1256
    %1332 = vst [vmem:[#allocation7 + $0x20] sm:$0xff] %v1259
    %1333 = vst [vmem:[#allocation7 + $0x28] sm:$0xff] %v1261
    %1334 = vst [vmem:[#allocation7 + $0x30] sm:$0xff] %v1264
    %1335 = vst [vmem:[#allocation7 + $0x38] sm:$0xff] %v1266
    %1336 = vst [vmem:[#allocation7 + $0x40] sm:$0xff] %v1269
    %1337 = vst [vmem:[#allocation7 + $0x48] sm:$0xff] %v1271
    %1338 = vst [vmem:[#allocation7 + $0x50] sm:$0xff] %v1274
    %1339 = vst [vmem:[#allocation7 + $0x58] sm:$0xff] %v1276
    %1340 = vst [vmem:[#allocation7 + $0x60] sm:$0xff] %v1279
    %1341 = vst [vmem:[#allocation7 + $0x68] sm:$0xff] %v1281
    %1342 = vst [vmem:[#allocation7 + $0x70] sm:$0xff] %v1284
    %1343 = vst [vmem:[#allocation7 + $0x78] sm:$0xff] %v1286
    %1344 = vst [vmem:[#allocation7 + $0x80] sm:$0xff] %v1289
    %1345 = vst [vmem:[#allocation7 + $0x88] sm:$0xff] %v1291
    %1346 = vst [vmem:[#allocation7 + $0x90] sm:$0xff] %v1294
    %1347 = vst [vmem:[#allocation7 + $0x98] sm:$0xff] %v1296
    %1348 = vst [vmem:[#allocation7 + $0xa0] sm:$0xff] %v1299
    %1349 = vst [vmem:[#allocation7 + $0xa8] sm:$0xff] %v1301
    %1350 = vst [vmem:[#allocation7 + $0xb0] sm:$0xff] %v1304
    %1351 = vst [vmem:[#allocation7 + $0xb8] sm:$0xff] %v1306
    %1352 = vst [vmem:[#allocation7 + $0xc0] sm:$0xff] %v1309
    %1353 = vst [vmem:[#allocation7 + $0xc8] sm:$0xff] %v1311
    %1354 = vst [vmem:[#allocation7 + $0xd0] sm:$0xff] %v1314
    %1355 = vst [vmem:[#allocation7 + $0xd8] sm:$0xff] %v1316
    %1356 = vst [vmem:[#allocation7 + $0xe0] sm:$0xff] %v1319
    %1357 = vst [vmem:[#allocation7 + $0xe8] sm:$0xff] %v1321
    %1358 = vst [vmem:[#allocation7 + $0xf0] sm:$0xff] %v1324
    %1359 = vst [vmem:[#allocation7 + $0xf8] sm:$0xff] %v1326
    // Predicated region
    $region38: #{tpu_custom_call.1} parent=1 // pred_check
      _
    $region39: #{tpu_custom_call.1} parent=1 // pred_check_branch
      %1361 = sbr.rel (0) target = $region41
    $region40: #{tpu_custom_call.1} parent=1 // pred_region
      %1363 = vsyncadd [#allocation4], 0
      %s1364 = sshll.u32 [#allocation7], 4
      %s1365 = int_to_ptr.vmem [resolvable:$true] %s1364
      %s1366 = sshll.u32 %s7, 4
      %s1367 = int_to_ptr.hbm [resolvable:$true] %s1366
      %1372 = dma.vmem_to_hbm [thread:$0]  %s1365, 4096, %s1367, [#allocation4], 128, 128, 8
    $region41: #{tpu_custom_call.1} parent=1 // pred_fallthru
      _
    // Predicated region
    $region42: #{tpu_custom_call.1} parent=1 // pred_check
      _
    $region43: #{tpu_custom_call.1} parent=1 // pred_check_branch
      %1374 = sbr.rel (0) target = $region45
    $region44: #{tpu_custom_call.1} parent=1 // pred_region
      %1376 = vsyncadd [#allocation9], 0
      %s1377 = sshll.u32 [#allocation8], 4
      %s1378 = int_to_ptr.vmem [resolvable:$true] %s1377
      %s1379 = sshll.u32 %s8, 4
      %s1380 = int_to_ptr.hbm [resolvable:$true] %s1379
      %1385 = dma.vmem_to_hbm [thread:$0]  %s1378, 4096, %s1380, [#allocation9], 128, 128, 8
    $region45: #{tpu_custom_call.1} parent=1 // pred_fallthru
      _
    // Predicated region
    $region46: #{tpu_custom_call.1} parent=1 // pred_check
      _
    $region47: #{tpu_custom_call.1} parent=1 // pred_check_branch
      %1387 = sbr.rel (0) target = $region49
    $region48: #{tpu_custom_call.1} parent=1 // pred_region
      %1389 = dma.done [#allocation4], 4096
    $region49: #{tpu_custom_call.1} parent=1 // pred_fallthru
      _
    // Predicated region
    $region50: #{tpu_custom_call.1} parent=1 // pred_check
      _
    $region51: #{tpu_custom_call.1} parent=1 // pred_check_branch
      %1391 = sbr.rel (0) target = $region53
    $region52: #{tpu_custom_call.1} parent=1 // pred_region
      %1393 = dma.done [#allocation9], 4096
    $region53: #{tpu_custom_call.1} parent=1 // pred_fallthru
      _
    %1394 = vsyncpa [#allocation3], 1
    %1395 = vsyncpa [#allocation6], 1
    %1396 = vsyncpa [#allocation4], 1
    %1397 = vsyncpa [#allocation9], 1

// kernel: tpu_custom_call.1
$region0: #{tpu_custom_call.1}
  #allocation0 [shape = 'u32[]', space=smem, size = 0x4, offset = 0x4, fixed_abs, tag = 'smem constant byte address 0x4 - core index']
  #allocation1 [shape = 'u32[72,128]{1,0:T(1,128)}', space=vmem, size = 0x9000, scoped, tag = 'internal scratch']
  %s0 = inlined_call_operand.hbm [shape: f32[256,128], index: 0, kind: input, shape index: {}]
  %s1 = inlined_call_operand.vmem [shape: bf16[128,64], index: 1, kind: input, shape index: {}]
  %s2 = inlined_call_operand.hbm [shape: f32[1,64], index: 2, kind: input, shape index: {}]
  %s3 = inlined_call_operand.vmem [shape: bf16[64,192], index: 3, kind: input, shape index: {}]
  %s4 = inlined_call_operand.vmem [shape: f32[1,192], index: 4, kind: input, shape index: {}]
  %s5 = inlined_call_operand.vmem [shape: bf16[64,128], index: 5, kind: input, shape index: {}]
  %s6 = inlined_call_operand.vmem [shape: f32[1,128], index: 6, kind: input, shape index: {}]
  %s7 = inlined_call_operand.hbm [shape: f32[256,128], index: 7, kind: output, shape index: {0}]
  %s8 = inlined_call_operand.hbm [shape: f32[256,128], index: 8, kind: output, shape index: {1}]
  %9 = xla_tuple %s7, %s8
  %s10 = sld [smem:[#allocation0]]
  $region54: #{tpu_custom_call.1} parent=0
    _
  %s12 = ssub.s32 1, %s10
  %s13 = scalar_select 0, %s12, %s10
  $region1: #{tpu_custom_call.1} parent=0
    #allocation2 [shape = 'u8[131072]{0}', space=vmem, size = 0x20000, scoped, tag = 'input window, operand 0, single buffered']
    #allocation3 [shape = 's32[1]{0}', space=sflag, size = 0x4, scoped, tag = 'scoped memory for tpu_custom_call.1']
    #allocation4 [shape = 's32[1]{0}', space=sflag, size = 0x4, scoped, tag = 'scoped memory for tpu_custom_call.1']
    #allocation5 [shape = 'u8[512]{0}', space=vmem, size = 0x400, scoped, tag = 'input window, operand 2, single buffered']
    #allocation6 [shape = 's32[1]{0}', space=sflag, size = 0x4, scoped, tag = 'scoped memory for tpu_custom_call.1']
    #allocation7 [shape = 'u8[131072]{0}', space=vmem, size = 0x20000, scoped, tag = 'output window, operand 0, single buffered']
    #allocation8 [shape = 'u8[131072]{0}', space=vmem, size = 0x20000, scoped, tag = 'output window, operand 1, single buffered']
    #allocation9 [shape = 's32[1]{0}', space=sflag, size = 0x4, scoped, tag = 'scoped memory for tpu_custom_call.1']
    %14 = vsyncpa [#allocation3], 0
    %15 = vsyncpa [#allocation6], 0
    %16 = vsyncpa [#allocation4], 0
    %17 = vsyncpa [#allocation9], 0
    // Predicated region
    $region2: #{tpu_custom_call.1} parent=1 // pred_check
      _
    $region3: #{tpu_custom_call.1} parent=1 // pred_check_branch
      %19 = sbr.rel (0) target = $region5
    $region4: #{tpu_custom_call.1} parent=1 // pred_region
      %21 = vsyncadd [#allocation3], 0
      %s22 = sshll.u32 %s0, 4
      %s23 = int_to_ptr.hbm [resolvable:$true] %s22
      %s24 = sshll.u32 [#allocation2], 4
      %s25 = int_to_ptr.vmem [resolvable:$true] %s24
      %30 = dma.hbm_to_vmem [thread:$0]  %s23, 4096, %s25, [#allocation3], 128, 128, 8
    $region5: #{tpu_custom_call.1} parent=1 // pred_fallthru
      _
    // Predicated region
    $region6: #{tpu_custom_call.1} parent=1 // pred_check
      _
    $region7: #{tpu_custom_call.1} parent=1 // pred_check_branch
      %32 = sbr.rel (0) target = $region9
    $region8: #{tpu_custom_call.1} parent=1 // pred_region
      _
    $region9: #{tpu_custom_call.1} parent=1 // pred_fallthru
      _
    // Predicated region
    $region10: #{tpu_custom_call.1} parent=1 // pred_check
      _
    $region11: #{tpu_custom_call.1} parent=1 // pred_check_branch
      %34 = sbr.rel (0) target = $region13
    $region12: #{tpu_custom_call.1} parent=1 // pred_region
      %36 = vsyncadd [#allocation6], 0
      %s38 = sshll.u32 %s2, 4
      %s39 = int_to_ptr.hbm [resolvable:$true] %s38
      %s40 = sshll.u32 [#allocation5], 4
      %s41 = int_to_ptr.vmem [resolvable:$true] %s40
      %43 = dma.hbm_to_vmem [thread:$0]  %s39, 16, %s41, [#allocation6]
    $region13: #{tpu_custom_call.1} parent=1 // pred_fallthru
      _
    // Predicated region
    $region14: #{tpu_custom_call.1} parent=1 // pred_check
      _
    $region15: #{tpu_custom_call.1} parent=1 // pred_check_branch
      %45 = sbr.rel (0) target = $region17
    $region16: #{tpu_custom_call.1} parent=1 // pred_region
      _
    $region17: #{tpu_custom_call.1} parent=1 // pred_fallthru
      _
    // Predicated region
    $region18: #{tpu_custom_call.1} parent=1 // pred_check
      _
    $region19: #{tpu_custom_call.1} parent=1 // pred_check_branch
      %47 = sbr.rel (0) target = $region21
    $region20: #{tpu_custom_call.1} parent=1 // pred_region
      _
    $region21: #{tpu_custom_call.1} parent=1 // pred_fallthru
      _
    // Predicated region
    $region22: #{tpu_custom_call.1} parent=1 // pred_check
      _
    $region23: #{tpu_custom_call.1} parent=1 // pred_check_branch
      %49 = sbr.rel (0) target = $region25
    $region24: #{tpu_custom_call.1} parent=1 // pred_region
      _
    $region25: #{tpu_custom_call.1} parent=1 // pred_fallthru
      _
    // Predicated region
    $region26: #{tpu_custom_call.1} parent=1 // pred_check
      _
    $region27: #{tpu_custom_call.1} parent=1 // pred_check_branch
      %51 = sbr.rel (0) target = $region29
    $region28: #{tpu_custom_call.1} parent=1 // pred_region
      _
    $region29: #{tpu_custom_call.1} parent=1 // pred_fallthru
      _
    // Predicated region
    $region30: #{tpu_custom_call.1} parent=1 // pred_check
      _
    $region31: #{tpu_custom_call.1} parent=1 // pred_check_branch
      %53 = sbr.rel (0) target = $region33
    $region32: #{tpu_custom_call.1} parent=1 // pred_region
      %55 = dma.done [#allocation3], 4096
    $region33: #{tpu_custom_call.1} parent=1 // pred_fallthru
      _
    // Predicated region
    $region34: #{tpu_custom_call.1} parent=1 // pred_check
      _
    $region35: #{tpu_custom_call.1} parent=1 // pred_check_branch
      %57 = sbr.rel (0) target = $region37
    $region36: #{tpu_custom_call.1} parent=1 // pred_region
      %59 = dma.done [#allocation6], 16
    $region37: #{tpu_custom_call.1} parent=1 // pred_fallthru
      _
    %v61 = vld [vmem:[#allocation2] sm:$0xff]
    %v62 = vld [vmem:[#allocation2 + $0x8] sm:$0xff]
    %v63 = vld [vmem:[#allocation2 + $0x10] sm:$0xff]
    %v64 = vld [vmem:[#allocation2 + $0x18] sm:$0xff]
    %v65 = vld [vmem:[#allocation2 + $0x20] sm:$0xff]
    %v66 = vld [vmem:[#allocation2 + $0x28] sm:$0xff]
    %v67 = vld [vmem:[#allocation2 + $0x30] sm:$0xff]
    %v68 = vld [vmem:[#allocation2 + $0x38] sm:$0xff]
    %v69 = vld [vmem:[#allocation2 + $0x40] sm:$0xff]
    %v70 = vld [vmem:[#allocation2 + $0x48] sm:$0xff]
    %v71 = vld [vmem:[#allocation2 + $0x50] sm:$0xff]
    %v72 = vld [vmem:[#allocation2 + $0x58] sm:$0xff]
    %v73 = vld [vmem:[#allocation2 + $0x60] sm:$0xff]
    %v74 = vld [vmem:[#allocation2 + $0x68] sm:$0xff]
    %v75 = vld [vmem:[#allocation2 + $0x70] sm:$0xff]
    %v76 = vld [vmem:[#allocation2 + $0x78] sm:$0xff]
    %v77 = vld [vmem:[#allocation2 + $0x80] sm:$0xff]
    %v78 = vld [vmem:[#allocation2 + $0x88] sm:$0xff]
    %v79 = vld [vmem:[#allocation2 + $0x90] sm:$0xff]
    %v80 = vld [vmem:[#allocation2 + $0x98] sm:$0xff]
    %v81 = vld [vmem:[#allocation2 + $0xa0] sm:$0xff]
    %v82 = vld [vmem:[#allocation2 + $0xa8] sm:$0xff]
    %v83 = vld [vmem:[#allocation2 + $0xb0] sm:$0xff]
    %v84 = vld [vmem:[#allocation2 + $0xb8] sm:$0xff]
    %v85 = vld [vmem:[#allocation2 + $0xc0] sm:$0xff]
    %v86 = vld [vmem:[#allocation2 + $0xc8] sm:$0xff]
    %v87 = vld [vmem:[#allocation2 + $0xd0] sm:$0xff]
    %v88 = vld [vmem:[#allocation2 + $0xd8] sm:$0xff]
    %v89 = vld [vmem:[#allocation2 + $0xe0] sm:$0xff]
    %v90 = vld [vmem:[#allocation2 + $0xe8] sm:$0xff]
    %v91 = vld [vmem:[#allocation2 + $0xf0] sm:$0xff]
    %v92 = vld [vmem:[#allocation2 + $0xf8] sm:$0xff]
    %v93 = vmul.f32 %v61, %v61
    %v94 = vmul.f32 %v62, %v62
    %v95 = vmul.f32 %v63, %v63
    %v96 = vmul.f32 %v64, %v64
    %v97 = vmul.f32 %v65, %v65
    %v98 = vmul.f32 %v66, %v66
    %v99 = vmul.f32 %v67, %v67
    %v100 = vmul.f32 %v68, %v68
    %v101 = vmul.f32 %v69, %v69
    %v102 = vmul.f32 %v70, %v70
    %v103 = vmul.f32 %v71, %v71
    %v104 = vmul.f32 %v72, %v72
    %v105 = vmul.f32 %v73, %v73
    %v106 = vmul.f32 %v74, %v74
    %v107 = vmul.f32 %v75, %v75
    %v108 = vmul.f32 %v76, %v76
    %v109 = vmul.f32 %v77, %v77
    %v110 = vmul.f32 %v78, %v78
    %v111 = vmul.f32 %v79, %v79
    %v112 = vmul.f32 %v80, %v80
    %v113 = vmul.f32 %v81, %v81
    %v114 = vmul.f32 %v82, %v82
    %v115 = vmul.f32 %v83, %v83
    %v116 = vmul.f32 %v84, %v84
    %v117 = vmul.f32 %v85, %v85
    %v118 = vmul.f32 %v86, %v86
    %v119 = vmul.f32 %v87, %v87
    %v120 = vmul.f32 %v88, %v88
    %v121 = vmul.f32 %v89, %v89
    %v122 = vmul.f32 %v90, %v90
    %v123 = vmul.f32 %v91, %v91
    %v124 = vmul.f32 %v92, %v92
    %125 = vadd.xlane.f32.xlu0 %v93
    %v126 = vpop.xlane.xlu0 %125
    %127 = vadd.xlane.f32.xlu0 %v94
    %v128 = vpop.xlane.xlu0 %127
    %129 = vadd.xlane.f32.xlu0 %v95
    %v130 = vpop.xlane.xlu0 %129
    %131 = vadd.xlane.f32.xlu0 %v96
    %v132 = vpop.xlane.xlu0 %131
    %133 = vadd.xlane.f32.xlu0 %v97
    %v134 = vpop.xlane.xlu0 %133
    %135 = vadd.xlane.f32.xlu0 %v98
    %v136 = vpop.xlane.xlu0 %135
    %137 = vadd.xlane.f32.xlu0 %v99
    %v138 = vpop.xlane.xlu0 %137
    %139 = vadd.xlane.f32.xlu0 %v100
    %v140 = vpop.xlane.xlu0 %139
    %141 = vadd.xlane.f32.xlu0 %v101
    %v142 = vpop.xlane.xlu0 %141
    %143 = vadd.xlane.f32.xlu0 %v102
    %v144 = vpop.xlane.xlu0 %143
    %145 = vadd.xlane.f32.xlu0 %v103
    %v146 = vpop.xlane.xlu0 %145
    %147 = vadd.xlane.f32.xlu0 %v104
    %v148 = vpop.xlane.xlu0 %147
    %149 = vadd.xlane.f32.xlu0 %v105
    %v150 = vpop.xlane.xlu0 %149
    %151 = vadd.xlane.f32.xlu0 %v106
    %v152 = vpop.xlane.xlu0 %151
    %153 = vadd.xlane.f32.xlu0 %v107
    %v154 = vpop.xlane.xlu0 %153
    %155 = vadd.xlane.f32.xlu0 %v108
    %v156 = vpop.xlane.xlu0 %155
    %157 = vadd.xlane.f32.xlu0 %v109
    %v158 = vpop.xlane.xlu0 %157
    %159 = vadd.xlane.f32.xlu0 %v110
    %v160 = vpop.xlane.xlu0 %159
    %161 = vadd.xlane.f32.xlu0 %v111
    %v162 = vpop.xlane.xlu0 %161
    %163 = vadd.xlane.f32.xlu0 %v112
    %v164 = vpop.xlane.xlu0 %163
    %165 = vadd.xlane.f32.xlu0 %v113
    %v166 = vpop.xlane.xlu0 %165
    %167 = vadd.xlane.f32.xlu0 %v114
    %v168 = vpop.xlane.xlu0 %167
    %169 = vadd.xlane.f32.xlu0 %v115
    %v170 = vpop.xlane.xlu0 %169
    %171 = vadd.xlane.f32.xlu0 %v116
    %v172 = vpop.xlane.xlu0 %171
    %173 = vadd.xlane.f32.xlu0 %v117
    %v174 = vpop.xlane.xlu0 %173
    %175 = vadd.xlane.f32.xlu0 %v118
    %v176 = vpop.xlane.xlu0 %175
    %177 = vadd.xlane.f32.xlu0 %v119
    %v178 = vpop.xlane.xlu0 %177
    %179 = vadd.xlane.f32.xlu0 %v120
    %v180 = vpop.xlane.xlu0 %179
    %181 = vadd.xlane.f32.xlu0 %v121
    %v182 = vpop.xlane.xlu0 %181
    %183 = vadd.xlane.f32.xlu0 %v122
    %v184 = vpop.xlane.xlu0 %183
    %185 = vadd.xlane.f32.xlu0 %v123
    %v186 = vpop.xlane.xlu0 %185
    %187 = vadd.xlane.f32.xlu0 %v124
    %v188 = vpop.xlane.xlu0 %187
    %v189 = vmax.f32 %v126, 1e-24
    %v190 = vmax.f32 %v128, 1e-24
    %v191 = vmax.f32 %v130, 1e-24
    %v192 = vmax.f32 %v132, 1e-24
    %v193 = vmax.f32 %v134, 1e-24
    %v194 = vmax.f32 %v136, 1e-24
    %v195 = vmax.f32 %v138, 1e-24
    %v196 = vmax.f32 %v140, 1e-24
    %v197 = vmax.f32 %v142, 1e-24
    %v198 = vmax.f32 %v144, 1e-24
    %v199 = vmax.f32 %v146, 1e-24
    %v200 = vmax.f32 %v148, 1e-24
    %v201 = vmax.f32 %v150, 1e-24
    %v202 = vmax.f32 %v152, 1e-24
    %v203 = vmax.f32 %v154, 1e-24
    %v204 = vmax.f32 %v156, 1e-24
    %v205 = vmax.f32 %v158, 1e-24
    %v206 = vmax.f32 %v160, 1e-24
    %v207 = vmax.f32 %v162, 1e-24
    %v208 = vmax.f32 %v164, 1e-24
    %v209 = vmax.f32 %v166, 1e-24
    %v210 = vmax.f32 %v168, 1e-24
    %v211 = vmax.f32 %v170, 1e-24
    %v212 = vmax.f32 %v172, 1e-24
    %v213 = vmax.f32 %v174, 1e-24
    %v214 = vmax.f32 %v176, 1e-24
    %v215 = vmax.f32 %v178, 1e-24
    %v216 = vmax.f32 %v180, 1e-24
    %v217 = vmax.f32 %v182, 1e-24
    %v218 = vmax.f32 %v184, 1e-24
    %v219 = vmax.f32 %v186, 1e-24
    %v220 = vmax.f32 %v188, 1e-24
    %v221 = vrsqrt.pop %v189
    %v222 = vmul.f32 %v221, %v189
    %v223 = vmul.f32 %v222, %v221
    %v224 = vmul.f32 0.5, %v223
    %v225 = vsub.f32 1.5, %v224
    %v226 = vmul.f32 %v221, %v225
    %vm227 = vweird.f32 %v189
    %vm228 = vweird.f32 %v221
    %vm229 = vmor %vm227, %vm228
    %v230 = vsel %vm229, %v221, %v226
    %v231 = vrsqrt.pop %v190
    %v232 = vmul.f32 %v231, %v190
    %v233 = vmul.f32 %v232, %v231
    %v234 = vmul.f32 0.5, %v233
    %v235 = vsub.f32 1.5, %v234
    %v236 = vmul.f32 %v231, %v235
    %vm237 = vweird.f32 %v190
    %vm238 = vweird.f32 %v231
    %vm239 = vmor %vm237, %vm238
    %v240 = vsel %vm239, %v231, %v236
    %v241 = vrsqrt.pop %v191
    %v242 = vmul.f32 %v241, %v191
    %v243 = vmul.f32 %v242, %v241
    %v244 = vmul.f32 0.5, %v243
    %v245 = vsub.f32 1.5, %v244
    %v246 = vmul.f32 %v241, %v245
    %vm247 = vweird.f32 %v191
    %vm248 = vweird.f32 %v241
    %vm249 = vmor %vm247, %vm248
    %v250 = vsel %vm249, %v241, %v246
    %v251 = vrsqrt.pop %v192
    %v252 = vmul.f32 %v251, %v192
    %v253 = vmul.f32 %v252, %v251
    %v254 = vmul.f32 0.5, %v253
    %v255 = vsub.f32 1.5, %v254
    %v256 = vmul.f32 %v251, %v255
    %vm257 = vweird.f32 %v192
    %vm258 = vweird.f32 %v251
    %vm259 = vmor %vm257, %vm258
    %v260 = vsel %vm259, %v251, %v256
    %v261 = vrsqrt.pop %v193
    %v262 = vmul.f32 %v261, %v193
    %v263 = vmul.f32 %v262, %v261
    %v264 = vmul.f32 0.5, %v263
    %v265 = vsub.f32 1.5, %v264
    %v266 = vmul.f32 %v261, %v265
    %vm267 = vweird.f32 %v193
    %vm268 = vweird.f32 %v261
    %vm269 = vmor %vm267, %vm268
    %v270 = vsel %vm269, %v261, %v266
    %v271 = vrsqrt.pop %v194
    %v272 = vmul.f32 %v271, %v194
    %v273 = vmul.f32 %v272, %v271
    %v274 = vmul.f32 0.5, %v273
    %v275 = vsub.f32 1.5, %v274
    %v276 = vmul.f32 %v271, %v275
    %vm277 = vweird.f32 %v194
    %vm278 = vweird.f32 %v271
    %vm279 = vmor %vm277, %vm278
    %v280 = vsel %vm279, %v271, %v276
    %v281 = vrsqrt.pop %v195
    %v282 = vmul.f32 %v281, %v195
    %v283 = vmul.f32 %v282, %v281
    %v284 = vmul.f32 0.5, %v283
    %v285 = vsub.f32 1.5, %v284
    %v286 = vmul.f32 %v281, %v285
    %vm287 = vweird.f32 %v195
    %vm288 = vweird.f32 %v281
    %vm289 = vmor %vm287, %vm288
    %v290 = vsel %vm289, %v281, %v286
    %v291 = vrsqrt.pop %v196
    %v292 = vmul.f32 %v291, %v196
    %v293 = vmul.f32 %v292, %v291
    %v294 = vmul.f32 0.5, %v293
    %v295 = vsub.f32 1.5, %v294
    %v296 = vmul.f32 %v291, %v295
    %vm297 = vweird.f32 %v196
    %vm298 = vweird.f32 %v291
    %vm299 = vmor %vm297, %vm298
    %v300 = vsel %vm299, %v291, %v296
    %v301 = vrsqrt.pop %v197
    %v302 = vmul.f32 %v301, %v197
    %v303 = vmul.f32 %v302, %v301
    %v304 = vmul.f32 0.5, %v303
    %v305 = vsub.f32 1.5, %v304
    %v306 = vmul.f32 %v301, %v305
    %vm307 = vweird.f32 %v197
    %vm308 = vweird.f32 %v301
    %vm309 = vmor %vm307, %vm308
    %v310 = vsel %vm309, %v301, %v306
    %v311 = vrsqrt.pop %v198
    %v312 = vmul.f32 %v311, %v198
    %v313 = vmul.f32 %v312, %v311
    %v314 = vmul.f32 0.5, %v313
    %v315 = vsub.f32 1.5, %v314
    %v316 = vmul.f32 %v311, %v315
    %vm317 = vweird.f32 %v198
    %vm318 = vweird.f32 %v311
    %vm319 = vmor %vm317, %vm318
    %v320 = vsel %vm319, %v311, %v316
    %v321 = vrsqrt.pop %v199
    %v322 = vmul.f32 %v321, %v199
    %v323 = vmul.f32 %v322, %v321
    %v324 = vmul.f32 0.5, %v323
    %v325 = vsub.f32 1.5, %v324
    %v326 = vmul.f32 %v321, %v325
    %vm327 = vweird.f32 %v199
    %vm328 = vweird.f32 %v321
    %vm329 = vmor %vm327, %vm328
    %v330 = vsel %vm329, %v321, %v326
    %v331 = vrsqrt.pop %v200
    %v332 = vmul.f32 %v331, %v200
    %v333 = vmul.f32 %v332, %v331
    %v334 = vmul.f32 0.5, %v333
    %v335 = vsub.f32 1.5, %v334
    %v336 = vmul.f32 %v331, %v335
    %vm337 = vweird.f32 %v200
    %vm338 = vweird.f32 %v331
    %vm339 = vmor %vm337, %vm338
    %v340 = vsel %vm339, %v331, %v336
    %v341 = vrsqrt.pop %v201
    %v342 = vmul.f32 %v341, %v201
    %v343 = vmul.f32 %v342, %v341
    %v344 = vmul.f32 0.5, %v343
    %v345 = vsub.f32 1.5, %v344
    %v346 = vmul.f32 %v341, %v345
    %vm347 = vweird.f32 %v201
    %vm348 = vweird.f32 %v341
    %vm349 = vmor %vm347, %vm348
    %v350 = vsel %vm349, %v341, %v346
    %v351 = vrsqrt.pop %v202
    %v352 = vmul.f32 %v351, %v202
    %v353 = vmul.f32 %v352, %v351
    %v354 = vmul.f32 0.5, %v353
    %v355 = vsub.f32 1.5, %v354
    %v356 = vmul.f32 %v351, %v355
    %vm357 = vweird.f32 %v202
    %vm358 = vweird.f32 %v351
    %vm359 = vmor %vm357, %vm358
    %v360 = vsel %vm359, %v351, %v356
    %v361 = vrsqrt.pop %v203
    %v362 = vmul.f32 %v361, %v203
    %v363 = vmul.f32 %v362, %v361
    %v364 = vmul.f32 0.5, %v363
    %v365 = vsub.f32 1.5, %v364
    %v366 = vmul.f32 %v361, %v365
    %vm367 = vweird.f32 %v203
    %vm368 = vweird.f32 %v361
    %vm369 = vmor %vm367, %vm368
    %v370 = vsel %vm369, %v361, %v366
    %v371 = vrsqrt.pop %v204
    %v372 = vmul.f32 %v371, %v204
    %v373 = vmul.f32 %v372, %v371
    %v374 = vmul.f32 0.5, %v373
    %v375 = vsub.f32 1.5, %v374
    %v376 = vmul.f32 %v371, %v375
    %vm377 = vweird.f32 %v204
    %vm378 = vweird.f32 %v371
    %vm379 = vmor %vm377, %vm378
    %v380 = vsel %vm379, %v371, %v376
    %v381 = vrsqrt.pop %v205
    %v382 = vmul.f32 %v381, %v205
    %v383 = vmul.f32 %v382, %v381
    %v384 = vmul.f32 0.5, %v383
    %v385 = vsub.f32 1.5, %v384
    %v386 = vmul.f32 %v381, %v385
    %vm387 = vweird.f32 %v205
    %vm388 = vweird.f32 %v381
    %vm389 = vmor %vm387, %vm388
    %v390 = vsel %vm389, %v381, %v386
    %v391 = vrsqrt.pop %v206
    %v392 = vmul.f32 %v391, %v206
    %v393 = vmul.f32 %v392, %v391
    %v394 = vmul.f32 0.5, %v393
    %v395 = vsub.f32 1.5, %v394
    %v396 = vmul.f32 %v391, %v395
    %vm397 = vweird.f32 %v206
    %vm398 = vweird.f32 %v391
    %vm399 = vmor %vm397, %vm398
    %v400 = vsel %vm399, %v391, %v396
    %v401 = vrsqrt.pop %v207
    %v402 = vmul.f32 %v401, %v207
    %v403 = vmul.f32 %v402, %v401
    %v404 = vmul.f32 0.5, %v403
    %v405 = vsub.f32 1.5, %v404
    %v406 = vmul.f32 %v401, %v405
    %vm407 = vweird.f32 %v207
    %vm408 = vweird.f32 %v401
    %vm409 = vmor %vm407, %vm408
    %v410 = vsel %vm409, %v401, %v406
    %v411 = vrsqrt.pop %v208
    %v412 = vmul.f32 %v411, %v208
    %v413 = vmul.f32 %v412, %v411
    %v414 = vmul.f32 0.5, %v413
    %v415 = vsub.f32 1.5, %v414
    %v416 = vmul.f32 %v411, %v415
    %vm417 = vweird.f32 %v208
    %vm418 = vweird.f32 %v411
    %vm419 = vmor %vm417, %vm418
    %v420 = vsel %vm419, %v411, %v416
    %v421 = vrsqrt.pop %v209
    %v422 = vmul.f32 %v421, %v209
    %v423 = vmul.f32 %v422, %v421
    %v424 = vmul.f32 0.5, %v423
    %v425 = vsub.f32 1.5, %v424
    %v426 = vmul.f32 %v421, %v425
    %vm427 = vweird.f32 %v209
    %vm428 = vweird.f32 %v421
    %vm429 = vmor %vm427, %vm428
    %v430 = vsel %vm429, %v421, %v426
    %v431 = vrsqrt.pop %v210
    %v432 = vmul.f32 %v431, %v210
    %v433 = vmul.f32 %v432, %v431
    %v434 = vmul.f32 0.5, %v433
    %v435 = vsub.f32 1.5, %v434
    %v436 = vmul.f32 %v431, %v435
    %vm437 = vweird.f32 %v210
    %vm438 = vweird.f32 %v431
    %vm439 = vmor %vm437, %vm438
    %v440 = vsel %vm439, %v431, %v436
    %v441 = vrsqrt.pop %v211
    %v442 = vmul.f32 %v441, %v211
    %v443 = vmul.f32 %v442, %v441
    %v444 = vmul.f32 0.5, %v443
    %v445 = vsub.f32 1.5, %v444
    %v446 = vmul.f32 %v441, %v445
    %vm447 = vweird.f32 %v211
    %vm448 = vweird.f32 %v441
    %vm449 = vmor %vm447, %vm448
    %v450 = vsel %vm449, %v441, %v446
    %v451 = vrsqrt.pop %v212
    %v452 = vmul.f32 %v451, %v212
    %v453 = vmul.f32 %v452, %v451
    %v454 = vmul.f32 0.5, %v453
    %v455 = vsub.f32 1.5, %v454
    %v456 = vmul.f32 %v451, %v455
    %vm457 = vweird.f32 %v212
    %vm458 = vweird.f32 %v451
    %vm459 = vmor %vm457, %vm458
    %v460 = vsel %vm459, %v451, %v456
    %v461 = vrsqrt.pop %v213
    %v462 = vmul.f32 %v461, %v213
    %v463 = vmul.f32 %v462, %v461
    %v464 = vmul.f32 0.5, %v463
    %v465 = vsub.f32 1.5, %v464
    %v466 = vmul.f32 %v461, %v465
    %vm467 = vweird.f32 %v213
    %vm468 = vweird.f32 %v461
    %vm469 = vmor %vm467, %vm468
    %v470 = vsel %vm469, %v461, %v466
    %v471 = vrsqrt.pop %v214
    %v472 = vmul.f32 %v471, %v214
    %v473 = vmul.f32 %v472, %v471
    %v474 = vmul.f32 0.5, %v473
    %v475 = vsub.f32 1.5, %v474
    %v476 = vmul.f32 %v471, %v475
    %vm477 = vweird.f32 %v214
    %vm478 = vweird.f32 %v471
    %vm479 = vmor %vm477, %vm478
    %v480 = vsel %vm479, %v471, %v476
    %v481 = vrsqrt.pop %v215
    %v482 = vmul.f32 %v481, %v215
    %v483 = vmul.f32 %v482, %v481
    %v484 = vmul.f32 0.5, %v483
    %v485 = vsub.f32 1.5, %v484
    %v486 = vmul.f32 %v481, %v485
    %vm487 = vweird.f32 %v215
    %vm488 = vweird.f32 %v481
    %vm489 = vmor %vm487, %vm488
    %v490 = vsel %vm489, %v481, %v486
    %v491 = vrsqrt.pop %v216
    %v492 = vmul.f32 %v491, %v216
    %v493 = vmul.f32 %v492, %v491
    %v494 = vmul.f32 0.5, %v493
    %v495 = vsub.f32 1.5, %v494
    %v496 = vmul.f32 %v491, %v495
    %vm497 = vweird.f32 %v216
    %vm498 = vweird.f32 %v491
    %vm499 = vmor %vm497, %vm498
    %v500 = vsel %vm499, %v491, %v496
    %v501 = vrsqrt.pop %v217
    %v502 = vmul.f32 %v501, %v217
    %v503 = vmul.f32 %v502, %v501
    %v504 = vmul.f32 0.5, %v503
    %v505 = vsub.f32 1.5, %v504
    %v506 = vmul.f32 %v501, %v505
    %vm507 = vweird.f32 %v217
    %vm508 = vweird.f32 %v501
    %vm509 = vmor %vm507, %vm508
    %v510 = vsel %vm509, %v501, %v506
    %v511 = vrsqrt.pop %v218
    %v512 = vmul.f32 %v511, %v218
    %v513 = vmul.f32 %v512, %v511
    %v514 = vmul.f32 0.5, %v513
    %v515 = vsub.f32 1.5, %v514
    %v516 = vmul.f32 %v511, %v515
    %vm517 = vweird.f32 %v218
    %vm518 = vweird.f32 %v511
    %vm519 = vmor %vm517, %vm518
    %v520 = vsel %vm519, %v511, %v516
    %v521 = vrsqrt.pop %v219
    %v522 = vmul.f32 %v521, %v219
    %v523 = vmul.f32 %v522, %v521
    %v524 = vmul.f32 0.5, %v523
    %v525 = vsub.f32 1.5, %v524
    %v526 = vmul.f32 %v521, %v525
    %vm527 = vweird.f32 %v219
    %vm528 = vweird.f32 %v521
    %vm529 = vmor %vm527, %vm528
    %v530 = vsel %vm529, %v521, %v526
    %v531 = vrsqrt.pop %v220
    %v532 = vmul.f32 %v531, %v220
    %v533 = vmul.f32 %v532, %v531
    %v534 = vmul.f32 0.5, %v533
    %v535 = vsub.f32 1.5, %v534
    %v536 = vmul.f32 %v531, %v535
    %vm537 = vweird.f32 %v220
    %vm538 = vweird.f32 %v531
    %vm539 = vmor %vm537, %vm538
    %v540 = vsel %vm539, %v531, %v536
    %v541 = vmul.f32 %v61, %v230
    %v542 = vmul.f32 %v62, %v240
    %v543 = vmul.f32 %v63, %v250
    %v544 = vmul.f32 %v64, %v260
    %v545 = vmul.f32 %v65, %v270
    %v546 = vmul.f32 %v66, %v280
    %v547 = vmul.f32 %v67, %v290
    %v548 = vmul.f32 %v68, %v300
    %v549 = vmul.f32 %v69, %v310
    %v550 = vmul.f32 %v70, %v320
    %v551 = vmul.f32 %v71, %v330
    %v552 = vmul.f32 %v72, %v340
    %v553 = vmul.f32 %v73, %v350
    %v554 = vmul.f32 %v74, %v360
    %v555 = vmul.f32 %v75, %v370
    %v556 = vmul.f32 %v76, %v380
    %v557 = vmul.f32 %v77, %v390
    %v558 = vmul.f32 %v78, %v400
    %v559 = vmul.f32 %v79, %v410
    %v560 = vmul.f32 %v80, %v420
    %v561 = vmul.f32 %v81, %v430
    %v562 = vmul.f32 %v82, %v440
    %v563 = vmul.f32 %v83, %v450
    %v564 = vmul.f32 %v84, %v460
    %v565 = vmul.f32 %v85, %v470
    %v566 = vmul.f32 %v86, %v480
    %v567 = vmul.f32 %v87, %v490
    %v568 = vmul.f32 %v88, %v500
    %v569 = vmul.f32 %v89, %v510
    %v570 = vmul.f32 %v90, %v520
    %v571 = vmul.f32 %v91, %v530
    %v572 = vmul.f32 %v92, %v540
    %v573 = vpack.c.bf16 %v542, %v541
    %v574 = vpack.c.bf16 %v544, %v543
    %v575 = vpack.c.bf16 %v546, %v545
    %v576 = vpack.c.bf16 %v548, %v547
    %v577 = vpack.c.bf16 %v550, %v549
    %v578 = vpack.c.bf16 %v552, %v551
    %v579 = vpack.c.bf16 %v554, %v553
    %v580 = vpack.c.bf16 %v556, %v555
    %v581 = vpack.c.bf16 %v558, %v557
    %v582 = vpack.c.bf16 %v560, %v559
    %v583 = vpack.c.bf16 %v562, %v561
    %v584 = vpack.c.bf16 %v564, %v563
    %v585 = vpack.c.bf16 %v566, %v565
    %v586 = vpack.c.bf16 %v568, %v567
    %v587 = vpack.c.bf16 %v570, %v569
    %v588 = vpack.c.bf16 %v572, %v571
    %v589 = vld [vmem:[%s1] sm:$0xf]
    %v590 = vld [vmem:[%s1 + $0x4] sm:$0xf]
    %v591 = vld [vmem:[%s1 + $0x8] sm:$0xf]
    %v592 = vld [vmem:[%s1 + $0xc] sm:$0xf]
    %v593 = vld [vmem:[%s1 + $0x10] sm:$0xf]
    %v594 = vld [vmem:[%s1 + $0x14] sm:$0xf]
    %v595 = vld [vmem:[%s1 + $0x18] sm:$0xf]
    %v596 = vld [vmem:[%s1 + $0x1c] sm:$0xf]
    %v597 = vld [vmem:[%s1 + $0x20] sm:$0xf]
    %v598 = vld [vmem:[%s1 + $0x24] sm:$0xf]
    %v599 = vld [vmem:[%s1 + $0x28] sm:$0xf]
    %v600 = vld [vmem:[%s1 + $0x2c] sm:$0xf]
    %v601 = vld [vmem:[%s1 + $0x30] sm:$0xf]
    %v602 = vld [vmem:[%s1 + $0x34] sm:$0xf]
    %v603 = vld [vmem:[%s1 + $0x38] sm:$0xf]
    %v604 = vld [vmem:[%s1 + $0x3c] sm:$0xf]
    %v605 = vld [vmem:[#allocation5] sm:$0x1]
    %v607 = vperm.slane %v605, 0
    %v625 = vunpack.c.l.b16 %v589
    %v626 = vunpack.c.l.b16 %v590
    %v627 = vunpack.c.l.b16 %v591
    %v628 = vunpack.c.l.b16 %v592
    %v629 = vunpack.c.l.b16 %v593
    %v630 = vunpack.c.l.b16 %v594
    %v631 = vunpack.c.l.b16 %v595
    %v632 = vunpack.c.l.b16 %v596
    %v633 = vunpack.c.l.b16 %v597
    %v634 = vunpack.c.l.b16 %v598
    %v635 = vunpack.c.l.b16 %v599
    %v636 = vunpack.c.l.b16 %v600
    %v637 = vunpack.c.l.b16 %v601
    %v638 = vunpack.c.l.b16 %v602
    %v639 = vunpack.c.l.b16 %v603
    %v640 = vunpack.c.l.b16 %v604
    %v641 = vpack.c.b16 %v626, %v625
    %v642 = vpack.c.b16 %v628, %v627
    %v643 = vpack.c.b16 %v630, %v629
    %v644 = vpack.c.b16 %v632, %v631
    %v645 = vpack.c.b16 %v634, %v633
    %v646 = vpack.c.b16 %v636, %v635
    %v647 = vpack.c.b16 %v638, %v637
    %v648 = vpack.c.b16 %v640, %v639
    %657 = vmatpush.bf16.msra.mxu0 %v648
    %658 = vmatpush.bf16.msra.mxu0 %v647
    %659 = vmatpush.bf16.msra.mxu0 %v646
    %660 = vmatpush.bf16.msra.mxu0 %v645
    %661 = vmatpush.bf16.msra.mxu0 %v644
    %662 = vmatpush.bf16.msra.mxu0 %v643
    %663 = vmatpush.bf16.msra.mxu0 %v642
    %664 = vmatpush.bf16.msra.mxu0 %v641
    %665 = vmatmul.bf16.gmra.mxu0 %v573
    %v666 = vpop.f32.mrf.mxu0
    %v667 = vadd.f32 %v607, %v666
    %v668 = vpop.f32.mrf.mxu0
    %v669 = vadd.f32 %v607, %v668
    %670 = vmatmul.bf16.gmra.mxu0 %v574
    %v671 = vpop.f32.mrf.mxu0
    %v672 = vadd.f32 %v607, %v671
    %v673 = vpop.f32.mrf.mxu0
    %v674 = vadd.f32 %v607, %v673
    %675 = vmatmul.bf16.gmra.mxu0 %v575
    %v676 = vpop.f32.mrf.mxu0
    %v677 = vadd.f32 %v607, %v676
    %v678 = vpop.f32.mrf.mxu0
    %v679 = vadd.f32 %v607, %v678
    %680 = vmatmul.bf16.gmra.mxu0 %v576
    %v681 = vpop.f32.mrf.mxu0
    %v682 = vadd.f32 %v607, %v681
    %v683 = vpop.f32.mrf.mxu0
    %v684 = vadd.f32 %v607, %v683
    %685 = vmatmul.bf16.gmra.mxu0 %v577
    %v686 = vpop.f32.mrf.mxu0
    %v687 = vadd.f32 %v607, %v686
    %v688 = vpop.f32.mrf.mxu0
    %v689 = vadd.f32 %v607, %v688
    %690 = vmatmul.bf16.gmra.mxu0 %v578
    %v691 = vpop.f32.mrf.mxu0
    %v692 = vadd.f32 %v607, %v691
    %v693 = vpop.f32.mrf.mxu0
    %v694 = vadd.f32 %v607, %v693
    %695 = vmatmul.bf16.gmra.mxu0 %v579
    %v696 = vpop.f32.mrf.mxu0
    %v697 = vadd.f32 %v607, %v696
    %v698 = vpop.f32.mrf.mxu0
    %v699 = vadd.f32 %v607, %v698
    %700 = vmatmul.bf16.gmra.mxu0 %v580
    %v701 = vpop.f32.mrf.mxu0
    %v702 = vadd.f32 %v607, %v701
    %v703 = vpop.f32.mrf.mxu0
    %v704 = vadd.f32 %v607, %v703
    %705 = vmatmul.bf16.gmra.mxu0 %v581
    %v706 = vpop.f32.mrf.mxu0
    %v707 = vadd.f32 %v607, %v706
    %v708 = vpop.f32.mrf.mxu0
    %v709 = vadd.f32 %v607, %v708
    %710 = vmatmul.bf16.gmra.mxu0 %v582
    %v711 = vpop.f32.mrf.mxu0
    %v712 = vadd.f32 %v607, %v711
    %v713 = vpop.f32.mrf.mxu0
    %v714 = vadd.f32 %v607, %v713
    %715 = vmatmul.bf16.gmra.mxu0 %v583
    %v716 = vpop.f32.mrf.mxu0
    %v717 = vadd.f32 %v607, %v716
    %v718 = vpop.f32.mrf.mxu0
    %v719 = vadd.f32 %v607, %v718
    %720 = vmatmul.bf16.gmra.mxu0 %v584
    %v721 = vpop.f32.mrf.mxu0
    %v722 = vadd.f32 %v607, %v721
    %v723 = vpop.f32.mrf.mxu0
    %v724 = vadd.f32 %v607, %v723
    %725 = vmatmul.bf16.gmra.mxu0 %v585
    %v726 = vpop.f32.mrf.mxu0
    %v727 = vadd.f32 %v607, %v726
    %v728 = vpop.f32.mrf.mxu0
    %v729 = vadd.f32 %v607, %v728
    %730 = vmatmul.bf16.gmra.mxu0 %v586
    %v731 = vpop.f32.mrf.mxu0
    %v732 = vadd.f32 %v607, %v731
    %v733 = vpop.f32.mrf.mxu0
    %v734 = vadd.f32 %v607, %v733
    %735 = vmatmul.bf16.gmra.mxu0 %v587
    %v736 = vpop.f32.mrf.mxu0
    %v737 = vadd.f32 %v607, %v736
    %v738 = vpop.f32.mrf.mxu0
    %v739 = vadd.f32 %v607, %v738
    %740 = vmatmul.bf16.gmra.mxu0 %v588
    %v741 = vpop.f32.mrf.mxu0
    %v742 = vadd.f32 %v607, %v741
    %v743 = vpop.f32.mrf.mxu0
    %v744 = vadd.f32 %v607, %v743
    %745 = vdwg.mxu0
    %v746 = vtanh.pop %v667
    %v747 = vtanh.pop %v669
    %v748 = vtanh.pop %v672
    %v749 = vtanh.pop %v674
    %v750 = vtanh.pop %v677
    %v751 = vtanh.pop %v679
    %v752 = vtanh.pop %v682
    %v753 = vtanh.pop %v684
    %v754 = vtanh.pop %v687
    %v755 = vtanh.pop %v689
    %v756 = vtanh.pop %v692
    %v757 = vtanh.pop %v694
    %v758 = vtanh.pop %v697
    %v759 = vtanh.pop %v699
    %v760 = vtanh.pop %v702
    %v761 = vtanh.pop %v704
    %v762 = vtanh.pop %v707
    %v763 = vtanh.pop %v709
    %v764 = vtanh.pop %v712
    %v765 = vtanh.pop %v714
    %v766 = vtanh.pop %v717
    %v767 = vtanh.pop %v719
    %v768 = vtanh.pop %v722
    %v769 = vtanh.pop %v724
    %v770 = vtanh.pop %v727
    %v771 = vtanh.pop %v729
    %v772 = vtanh.pop %v732
    %v773 = vtanh.pop %v734
    %v774 = vtanh.pop %v737
    %v775 = vtanh.pop %v739
    %v776 = vtanh.pop %v742
    %v777 = vtanh.pop %v744
    %v778 = vpack.c.bf16 %v747, %v746
    %v779 = vpack.c.bf16 %v749, %v748
    %v780 = vpack.c.bf16 %v751, %v750
    %v781 = vpack.c.bf16 %v753, %v752
    %v782 = vpack.c.bf16 %v755, %v754
    %v783 = vpack.c.bf16 %v757, %v756
    %v784 = vpack.c.bf16 %v759, %v758
    %v785 = vpack.c.bf16 %v761, %v760
    %v786 = vpack.c.bf16 %v763, %v762
    %v787 = vpack.c.bf16 %v765, %v764
    %v788 = vpack.c.bf16 %v767, %v766
    %v789 = vpack.c.bf16 %v769, %v768
    %v790 = vpack.c.bf16 %v771, %v770
    %v791 = vpack.c.bf16 %v773, %v772
    %v792 = vpack.c.bf16 %v775, %v774
    %v793 = vpack.c.bf16 %v777, %v776
    %v794 = vld [vmem:[%s3] sm:$0xff]
    %v795 = vld [vmem:[%s3 + $0x8] sm:$0xff]
    %v796 = vld [vmem:[%s3 + $0x10] sm:$0xff]
    %v797 = vld [vmem:[%s3 + $0x18] sm:$0xff]
    %v798 = vld [vmem:[%s3 + $0x20] sm:$0xff]
    %v799 = vld [vmem:[%s3 + $0x28] sm:$0xff]
    %v800 = vld [vmem:[%s3 + $0x30] sm:$0xff]
    %v801 = vld [vmem:[%s3 + $0x38] sm:$0xff]
    %v802 = vld [vmem:[%s4] sm:$0x3]
    %v804 = vperm.slane %v802, 0
    %v805 = vperm.slane %v802, 1
    %v816 = vunpack.c.l.b16 %v794
    %v817 = vunpack.c.h.b16 %v794
    %v818 = vunpack.c.l.b16 %v795
    %v819 = vunpack.c.h.b16 %v795
    %v820 = vunpack.c.l.b16 %v796
    %v821 = vunpack.c.h.b16 %v796
    %v822 = vunpack.c.l.b16 %v797
    %v823 = vunpack.c.h.b16 %v797
    %v824 = vunpack.c.l.b16 %v798
    %v825 = vunpack.c.h.b16 %v798
    %v826 = vunpack.c.l.b16 %v799
    %v827 = vunpack.c.h.b16 %v799
    %v828 = vunpack.c.l.b16 %v800
    %v829 = vunpack.c.h.b16 %v800
    %v830 = vunpack.c.l.b16 %v801
    %v831 = vunpack.c.h.b16 %v801
    %v832 = vpack.c.b16 %v818, %v816
    %v833 = vpack.c.b16 %v819, %v817
    %v834 = vpack.c.b16 %v822, %v820
    %v835 = vpack.c.b16 %v823, %v821
    %v836 = vpack.c.b16 %v826, %v824
    %v837 = vpack.c.b16 %v827, %v825
    %v838 = vpack.c.b16 %v830, %v828
    %v839 = vpack.c.b16 %v831, %v829
    %vm848 = vcmask 523264
    %v850 = vsel %vm848, %v778, 0
    %v853 = vsel %vm848, %v779, 0
    %v856 = vsel %vm848, %v780, 0
    %v859 = vsel %vm848, %v781, 0
    %v862 = vsel %vm848, %v782, 0
    %v865 = vsel %vm848, %v783, 0
    %v868 = vsel %vm848, %v784, 0
    %v871 = vsel %vm848, %v785, 0
    %v874 = vsel %vm848, %v786, 0
    %v877 = vsel %vm848, %v787, 0
    %v880 = vsel %vm848, %v788, 0
    %v883 = vsel %vm848, %v789, 0
    %v886 = vsel %vm848, %v790, 0
    %v889 = vsel %vm848, %v791, 0
    %v892 = vsel %vm848, %v792, 0
    %v895 = vsel %vm848, %v793, 0
    %897 = vmatpush.bf16.msra.mxu0 0
    %898 = vmatpush.bf16.msra.mxu0 0
    %899 = vmatpush.bf16.msra.mxu0 0
    %900 = vmatpush.bf16.msra.mxu0 0
    %901 = vmatpush.bf16.msra.mxu0 %v838
    %902 = vmatpush.bf16.msra.mxu0 %v836
    %903 = vmatpush.bf16.msra.mxu0 %v834
    %904 = vmatpush.bf16.msra.mxu0 %v832
    %905 = vmatmul.bf16.gmra.mxu0 %v850
    %v906 = vpop.f32.mrf.mxu0
    %v907 = vadd.f32 %v804, %v906
    %v908 = vpop.f32.mrf.mxu0
    %v909 = vadd.f32 %v804, %v908
    %910 = vmatmul.bf16.gmra.mxu0 %v853
    %v911 = vpop.f32.mrf.mxu0
    %v912 = vadd.f32 %v804, %v911
    %v913 = vpop.f32.mrf.mxu0
    %v914 = vadd.f32 %v804, %v913
    %915 = vmatmul.bf16.gmra.mxu0 %v856
    %v916 = vpop.f32.mrf.mxu0
    %v917 = vadd.f32 %v804, %v916
    %v918 = vpop.f32.mrf.mxu0
    %v919 = vadd.f32 %v804, %v918
    %920 = vmatmul.bf16.gmra.mxu0 %v859
    %v921 = vpop.f32.mrf.mxu0
    %v922 = vadd.f32 %v804, %v921
    %v923 = vpop.f32.mrf.mxu0
    %v924 = vadd.f32 %v804, %v923
    %925 = vmatmul.bf16.gmra.mxu0 %v862
    %v926 = vpop.f32.mrf.mxu0
    %v927 = vadd.f32 %v804, %v926
    %v928 = vpop.f32.mrf.mxu0
    %v929 = vadd.f32 %v804, %v928
    %930 = vmatmul.bf16.gmra.mxu0 %v865
    %v931 = vpop.f32.mrf.mxu0
    %v932 = vadd.f32 %v804, %v931
    %v933 = vpop.f32.mrf.mxu0
    %v934 = vadd.f32 %v804, %v933
    %935 = vmatmul.bf16.gmra.mxu0 %v868
    %v936 = vpop.f32.mrf.mxu0
    %v937 = vadd.f32 %v804, %v936
    %v938 = vpop.f32.mrf.mxu0
    %v939 = vadd.f32 %v804, %v938
    %940 = vmatmul.bf16.gmra.mxu0 %v871
    %v941 = vpop.f32.mrf.mxu0
    %v942 = vadd.f32 %v804, %v941
    %v943 = vpop.f32.mrf.mxu0
    %v944 = vadd.f32 %v804, %v943
    %945 = vmatmul.bf16.gmra.mxu0 %v874
    %v946 = vpop.f32.mrf.mxu0
    %v947 = vadd.f32 %v804, %v946
    %v948 = vpop.f32.mrf.mxu0
    %v949 = vadd.f32 %v804, %v948
    %950 = vmatmul.bf16.gmra.mxu0 %v877
    %v951 = vpop.f32.mrf.mxu0
    %v952 = vadd.f32 %v804, %v951
    %v953 = vpop.f32.mrf.mxu0
    %v954 = vadd.f32 %v804, %v953
    %955 = vmatmul.bf16.gmra.mxu0 %v880
    %v956 = vpop.f32.mrf.mxu0
    %v957 = vadd.f32 %v804, %v956
    %v958 = vpop.f32.mrf.mxu0
    %v959 = vadd.f32 %v804, %v958
    %960 = vmatmul.bf16.gmra.mxu0 %v883
    %v961 = vpop.f32.mrf.mxu0
    %v962 = vadd.f32 %v804, %v961
    %v963 = vpop.f32.mrf.mxu0
    %v964 = vadd.f32 %v804, %v963
    %965 = vmatmul.bf16.gmra.mxu0 %v886
    %v966 = vpop.f32.mrf.mxu0
    %v967 = vadd.f32 %v804, %v966
    %v968 = vpop.f32.mrf.mxu0
    %v969 = vadd.f32 %v804, %v968
    %970 = vmatmul.bf16.gmra.mxu0 %v889
    %v971 = vpop.f32.mrf.mxu0
    %v972 = vadd.f32 %v804, %v971
    %v973 = vpop.f32.mrf.mxu0
    %v974 = vadd.f32 %v804, %v973
    %975 = vmatmul.bf16.gmra.mxu0 %v892
    %v976 = vpop.f32.mrf.mxu0
    %v977 = vadd.f32 %v804, %v976
    %v978 = vpop.f32.mrf.mxu0
    %v979 = vadd.f32 %v804, %v978
    %980 = vmatmul.bf16.gmra.mxu0 %v895
    %v981 = vpop.f32.mrf.mxu0
    %v982 = vadd.f32 %v804, %v981
    %v983 = vpop.f32.mrf.mxu0
    %v984 = vadd.f32 %v804, %v983
    %985 = vdwg.mxu0
    %986 = vmatpush.bf16.msra.mxu0 0
    %987 = vmatpush.bf16.msra.mxu0 0
    %988 = vmatpush.bf16.msra.mxu0 0
    %989 = vmatpush.bf16.msra.mxu0 0
    %990 = vmatpush.bf16.msra.mxu0 %v839
    %991 = vmatpush.bf16.msra.mxu0 %v837
    %992 = vmatpush.bf16.msra.mxu0 %v835
    %993 = vmatpush.bf16.msra.mxu0 %v833
    %994 = vmatmul.bf16.gmra.mxu0 %v850
    %v995 = vpop.f32.mrf.mxu0
    %v996 = vadd.f32 %v805, %v995
    %v997 = vpop.f32.mrf.mxu0
    %v998 = vadd.f32 %v805, %v997
    %999 = vmatmul.bf16.gmra.mxu0 %v853
    %v1000 = vpop.f32.mrf.mxu0
    %v1001 = vadd.f32 %v805, %v1000
    %v1002 = vpop.f32.mrf.mxu0
    %v1003 = vadd.f32 %v805, %v1002
    %1004 = vmatmul.bf16.gmra.mxu0 %v856
    %v1005 = vpop.f32.mrf.mxu0
    %v1006 = vadd.f32 %v805, %v1005
    %v1007 = vpop.f32.mrf.mxu0
    %v1008 = vadd.f32 %v805, %v1007
    %1009 = vmatmul.bf16.gmra.mxu0 %v859
    %v1010 = vpop.f32.mrf.mxu0
    %v1011 = vadd.f32 %v805, %v1010
    %v1012 = vpop.f32.mrf.mxu0
    %v1013 = vadd.f32 %v805, %v1012
    %1014 = vmatmul.bf16.gmra.mxu0 %v862
    %v1015 = vpop.f32.mrf.mxu0
    %v1016 = vadd.f32 %v805, %v1015
    %v1017 = vpop.f32.mrf.mxu0
    %v1018 = vadd.f32 %v805, %v1017
    %1019 = vmatmul.bf16.gmra.mxu0 %v865
    %v1020 = vpop.f32.mrf.mxu0
    %v1021 = vadd.f32 %v805, %v1020
    %v1022 = vpop.f32.mrf.mxu0
    %v1023 = vadd.f32 %v805, %v1022
    %1024 = vmatmul.bf16.gmra.mxu0 %v868
    %v1025 = vpop.f32.mrf.mxu0
    %v1026 = vadd.f32 %v805, %v1025
    %v1027 = vpop.f32.mrf.mxu0
    %v1028 = vadd.f32 %v805, %v1027
    %1029 = vmatmul.bf16.gmra.mxu0 %v871
    %v1030 = vpop.f32.mrf.mxu0
    %v1031 = vadd.f32 %v805, %v1030
    %v1032 = vpop.f32.mrf.mxu0
    %v1033 = vadd.f32 %v805, %v1032
    %1034 = vmatmul.bf16.gmra.mxu0 %v874
    %v1035 = vpop.f32.mrf.mxu0
    %v1036 = vadd.f32 %v805, %v1035
    %v1037 = vpop.f32.mrf.mxu0
    %v1038 = vadd.f32 %v805, %v1037
    %1039 = vmatmul.bf16.gmra.mxu0 %v877
    %v1040 = vpop.f32.mrf.mxu0
    %v1041 = vadd.f32 %v805, %v1040
    %v1042 = vpop.f32.mrf.mxu0
    %v1043 = vadd.f32 %v805, %v1042
    %1044 = vmatmul.bf16.gmra.mxu0 %v880
    %v1045 = vpop.f32.mrf.mxu0
    %v1046 = vadd.f32 %v805, %v1045
    %v1047 = vpop.f32.mrf.mxu0
    %v1048 = vadd.f32 %v805, %v1047
    %1049 = vmatmul.bf16.gmra.mxu0 %v883
    %v1050 = vpop.f32.mrf.mxu0
    %v1051 = vadd.f32 %v805, %v1050
    %v1052 = vpop.f32.mrf.mxu0
    %v1053 = vadd.f32 %v805, %v1052
    %1054 = vmatmul.bf16.gmra.mxu0 %v886
    %v1055 = vpop.f32.mrf.mxu0
    %v1056 = vadd.f32 %v805, %v1055
    %v1057 = vpop.f32.mrf.mxu0
    %v1058 = vadd.f32 %v805, %v1057
    %1059 = vmatmul.bf16.gmra.mxu0 %v889
    %v1060 = vpop.f32.mrf.mxu0
    %v1061 = vadd.f32 %v805, %v1060
    %v1062 = vpop.f32.mrf.mxu0
    %v1063 = vadd.f32 %v805, %v1062
    %1064 = vmatmul.bf16.gmra.mxu0 %v892
    %v1065 = vpop.f32.mrf.mxu0
    %v1066 = vadd.f32 %v805, %v1065
    %v1067 = vpop.f32.mrf.mxu0
    %v1068 = vadd.f32 %v805, %v1067
    %1069 = vmatmul.bf16.gmra.mxu0 %v895
    %v1070 = vpop.f32.mrf.mxu0
    %v1071 = vadd.f32 %v805, %v1070
    %v1072 = vpop.f32.mrf.mxu0
    %v1073 = vadd.f32 %v805, %v1072
    %1074 = vdwg.mxu0
    %1075 = vst [vmem:[#allocation8] sm:$0xff] %v907
    %1076 = vst [vmem:[#allocation8 + $0x8] sm:$0xff] %v909
    %1077 = vst [vmem:[#allocation8 + $0x10] sm:$0xff] %v912
    %1078 = vst [vmem:[#allocation8 + $0x18] sm:$0xff] %v914
    %1079 = vst [vmem:[#allocation8 + $0x20] sm:$0xff] %v917
    %1080 = vst [vmem:[#allocation8 + $0x28] sm:$0xff] %v919
    %1081 = vst [vmem:[#allocation8 + $0x30] sm:$0xff] %v922
    %1082 = vst [vmem:[#allocation8 + $0x38] sm:$0xff] %v924
    %1083 = vst [vmem:[#allocation8 + $0x40] sm:$0xff] %v927
    %1084 = vst [vmem:[#allocation8 + $0x48] sm:$0xff] %v929
    %1085 = vst [vmem:[#allocation8 + $0x50] sm:$0xff] %v932
    %1086 = vst [vmem:[#allocation8 + $0x58] sm:$0xff] %v934
    %1087 = vst [vmem:[#allocation8 + $0x60] sm:$0xff] %v937
    %1088 = vst [vmem:[#allocation8 + $0x68] sm:$0xff] %v939
    %1089 = vst [vmem:[#allocation8 + $0x70] sm:$0xff] %v942
    %1090 = vst [vmem:[#allocation8 + $0x78] sm:$0xff] %v944
    %1091 = vst [vmem:[#allocation8 + $0x80] sm:$0xff] %v947
    %1092 = vst [vmem:[#allocation8 + $0x88] sm:$0xff] %v949
    %1093 = vst [vmem:[#allocation8 + $0x90] sm:$0xff] %v952
    %1094 = vst [vmem:[#allocation8 + $0x98] sm:$0xff] %v954
    %1095 = vst [vmem:[#allocation8 + $0xa0] sm:$0xff] %v957
    %1096 = vst [vmem:[#allocation8 + $0xa8] sm:$0xff] %v959
    %1097 = vst [vmem:[#allocation8 + $0xb0] sm:$0xff] %v962
    %1098 = vst [vmem:[#allocation8 + $0xb8] sm:$0xff] %v964
    %1099 = vst [vmem:[#allocation8 + $0xc0] sm:$0xff] %v967
    %1100 = vst [vmem:[#allocation8 + $0xc8] sm:$0xff] %v969
    %1101 = vst [vmem:[#allocation8 + $0xd0] sm:$0xff] %v972
    %1102 = vst [vmem:[#allocation8 + $0xd8] sm:$0xff] %v974
    %1103 = vst [vmem:[#allocation8 + $0xe0] sm:$0xff] %v977
    %1104 = vst [vmem:[#allocation8 + $0xe8] sm:$0xff] %v979
    %1105 = vst [vmem:[#allocation8 + $0xf0] sm:$0xff] %v982
    %1106 = vst [vmem:[#allocation8 + $0xf8] sm:$0xff] %v984
    %v1107 = vtanh.pop %v996
    %v1108 = vtanh.pop %v998
    %v1109 = vtanh.pop %v1001
    %v1110 = vtanh.pop %v1003
    %v1111 = vtanh.pop %v1006
    %v1112 = vtanh.pop %v1008
    %v1113 = vtanh.pop %v1011
    %v1114 = vtanh.pop %v1013
    %v1115 = vtanh.pop %v1016
    %v1116 = vtanh.pop %v1018
    %v1117 = vtanh.pop %v1021
    %v1118 = vtanh.pop %v1023
    %v1119 = vtanh.pop %v1026
    %v1120 = vtanh.pop %v1028
    %v1121 = vtanh.pop %v1031
    %v1122 = vtanh.pop %v1033
    %v1123 = vtanh.pop %v1036
    %v1124 = vtanh.pop %v1038
    %v1125 = vtanh.pop %v1041
    %v1126 = vtanh.pop %v1043
    %v1127 = vtanh.pop %v1046
    %v1128 = vtanh.pop %v1048
    %v1129 = vtanh.pop %v1051
    %v1130 = vtanh.pop %v1053
    %v1131 = vtanh.pop %v1056
    %v1132 = vtanh.pop %v1058
    %v1133 = vtanh.pop %v1061
    %v1134 = vtanh.pop %v1063
    %v1135 = vtanh.pop %v1066
    %v1136 = vtanh.pop %v1068
    %v1137 = vtanh.pop %v1071
    %v1138 = vtanh.pop %v1073
    %v1139 = vpack.c.bf16 %v1108, %v1107
    %v1140 = vpack.c.bf16 %v1110, %v1109
    %v1141 = vpack.c.bf16 %v1112, %v1111
    %v1142 = vpack.c.bf16 %v1114, %v1113
    %v1143 = vpack.c.bf16 %v1116, %v1115
    %v1144 = vpack.c.bf16 %v1118, %v1117
    %v1145 = vpack.c.bf16 %v1120, %v1119
    %v1146 = vpack.c.bf16 %v1122, %v1121
    %v1147 = vpack.c.bf16 %v1124, %v1123
    %v1148 = vpack.c.bf16 %v1126, %v1125
    %v1149 = vpack.c.bf16 %v1128, %v1127
    %v1150 = vpack.c.bf16 %v1130, %v1129
    %v1151 = vpack.c.bf16 %v1132, %v1131
    %v1152 = vpack.c.bf16 %v1134, %v1133
    %v1153 = vpack.c.bf16 %v1136, %v1135
    %v1154 = vpack.c.bf16 %v1138, %v1137
    %v1155 = vld [vmem:[%s5] sm:$0xf]
    %v1156 = vld [vmem:[%s5 + $0x4] sm:$0xf]
    %v1157 = vld [vmem:[%s5 + $0x8] sm:$0xf]
    %v1158 = vld [vmem:[%s5 + $0xc] sm:$0xf]
    %v1159 = vld [vmem:[%s5 + $0x10] sm:$0xf]
    %v1160 = vld [vmem:[%s5 + $0x14] sm:$0xf]
    %v1161 = vld [vmem:[%s5 + $0x18] sm:$0xf]
    %v1162 = vld [vmem:[%s5 + $0x1c] sm:$0xf]
    %v1163 = vld [vmem:[%s6] sm:$0x1]
    %v1165 = vperm.slane %v1163, 0
    %v1175 = vunpack.c.l.b16 %v1155
    %v1176 = vunpack.c.l.b16 %v1156
    %v1177 = vunpack.c.l.b16 %v1157
    %v1178 = vunpack.c.l.b16 %v1158
    %v1179 = vunpack.c.l.b16 %v1159
    %v1180 = vunpack.c.l.b16 %v1160
    %v1181 = vunpack.c.l.b16 %v1161
    %v1182 = vunpack.c.l.b16 %v1162
    %v1183 = vpack.c.b16 %v1176, %v1175
    %v1184 = vpack.c.b16 %v1178, %v1177
    %v1185 = vpack.c.b16 %v1180, %v1179
    %v1186 = vpack.c.b16 %v1182, %v1181
    %v1192 = vsel %vm848, %v1139, 0
    %v1195 = vsel %vm848, %v1140, 0
    %v1198 = vsel %vm848, %v1141, 0
    %v1201 = vsel %vm848, %v1142, 0
    %v1204 = vsel %vm848, %v1143, 0
    %v1207 = vsel %vm848, %v1144, 0
    %v1210 = vsel %vm848, %v1145, 0
    %v1213 = vsel %vm848, %v1146, 0
    %v1216 = vsel %vm848, %v1147, 0
    %v1219 = vsel %vm848, %v1148, 0
    %v1222 = vsel %vm848, %v1149, 0
    %v1225 = vsel %vm848, %v1150, 0
    %v1228 = vsel %vm848, %v1151, 0
    %v1231 = vsel %vm848, %v1152, 0
    %v1234 = vsel %vm848, %v1153, 0
    %v1237 = vsel %vm848, %v1154, 0
    %1239 = vmatpush.bf16.msra.mxu0 0
    %1240 = vmatpush.bf16.msra.mxu0 0
    %1241 = vmatpush.bf16.msra.mxu0 0
    %1242 = vmatpush.bf16.msra.mxu0 0
    %1243 = vmatpush.bf16.msra.mxu0 %v1186
    %1244 = vmatpush.bf16.msra.mxu0 %v1185
    %1245 = vmatpush.bf16.msra.mxu0 %v1184
    %1246 = vmatpush.bf16.msra.mxu0 %v1183
    %1247 = vmatmul.bf16.gmra.mxu0 %v1192
    %v1248 = vpop.f32.mrf.mxu0
    %v1249 = vadd.f32 %v1165, %v1248
    %v1250 = vpop.f32.mrf.mxu0
    %v1251 = vadd.f32 %v1165, %v1250
    %1252 = vmatmul.bf16.gmra.mxu0 %v1195
    %v1253 = vpop.f32.mrf.mxu0
    %v1254 = vadd.f32 %v1165, %v1253
    %v1255 = vpop.f32.mrf.mxu0
    %v1256 = vadd.f32 %v1165, %v1255
    %1257 = vmatmul.bf16.gmra.mxu0 %v1198
    %v1258 = vpop.f32.mrf.mxu0
    %v1259 = vadd.f32 %v1165, %v1258
    %v1260 = vpop.f32.mrf.mxu0
    %v1261 = vadd.f32 %v1165, %v1260
    %1262 = vmatmul.bf16.gmra.mxu0 %v1201
    %v1263 = vpop.f32.mrf.mxu0
    %v1264 = vadd.f32 %v1165, %v1263
    %v1265 = vpop.f32.mrf.mxu0
    %v1266 = vadd.f32 %v1165, %v1265
    %1267 = vmatmul.bf16.gmra.mxu0 %v1204
    %v1268 = vpop.f32.mrf.mxu0
    %v1269 = vadd.f32 %v1165, %v1268
    %v1270 = vpop.f32.mrf.mxu0
    %v1271 = vadd.f32 %v1165, %v1270
    %1272 = vmatmul.bf16.gmra.mxu0 %v1207
    %v1273 = vpop.f32.mrf.mxu0
    %v1274 = vadd.f32 %v1165, %v1273
    %v1275 = vpop.f32.mrf.mxu0
    %v1276 = vadd.f32 %v1165, %v1275
    %1277 = vmatmul.bf16.gmra.mxu0 %v1210
    %v1278 = vpop.f32.mrf.mxu0
    %v1279 = vadd.f32 %v1165, %v1278
    %v1280 = vpop.f32.mrf.mxu0
    %v1281 = vadd.f32 %v1165, %v1280
    %1282 = vmatmul.bf16.gmra.mxu0 %v1213
    %v1283 = vpop.f32.mrf.mxu0
    %v1284 = vadd.f32 %v1165, %v1283
    %v1285 = vpop.f32.mrf.mxu0
    %v1286 = vadd.f32 %v1165, %v1285
    %1287 = vmatmul.bf16.gmra.mxu0 %v1216
    %v1288 = vpop.f32.mrf.mxu0
    %v1289 = vadd.f32 %v1165, %v1288
    %v1290 = vpop.f32.mrf.mxu0
    %v1291 = vadd.f32 %v1165, %v1290
    %1292 = vmatmul.bf16.gmra.mxu0 %v1219
    %v1293 = vpop.f32.mrf.mxu0
    %v1294 = vadd.f32 %v1165, %v1293
    %v1295 = vpop.f32.mrf.mxu0
    %v1296 = vadd.f32 %v1165, %v1295
    %1297 = vmatmul.bf16.gmra.mxu0 %v1222
    %v1298 = vpop.f32.mrf.mxu0
    %v1299 = vadd.f32 %v1165, %v1298
    %v1300 = vpop.f32.mrf.mxu0
    %v1301 = vadd.f32 %v1165, %v1300
    %1302 = vmatmul.bf16.gmra.mxu0 %v1225
    %v1303 = vpop.f32.mrf.mxu0
    %v1304 = vadd.f32 %v1165, %v1303
    %v1305 = vpop.f32.mrf.mxu0
    %v1306 = vadd.f32 %v1165, %v1305
    %1307 = vmatmul.bf16.gmra.mxu0 %v1228
    %v1308 = vpop.f32.mrf.mxu0
    %v1309 = vadd.f32 %v1165, %v1308
    %v1310 = vpop.f32.mrf.mxu0
    %v1311 = vadd.f32 %v1165, %v1310
    %1312 = vmatmul.bf16.gmra.mxu0 %v1231
    %v1313 = vpop.f32.mrf.mxu0
    %v1314 = vadd.f32 %v1165, %v1313
    %v1315 = vpop.f32.mrf.mxu0
    %v1316 = vadd.f32 %v1165, %v1315
    %1317 = vmatmul.bf16.gmra.mxu0 %v1234
    %v1318 = vpop.f32.mrf.mxu0
    %v1319 = vadd.f32 %v1165, %v1318
    %v1320 = vpop.f32.mrf.mxu0
    %v1321 = vadd.f32 %v1165, %v1320
    %1322 = vmatmul.bf16.gmra.mxu0 %v1237
    %v1323 = vpop.f32.mrf.mxu0
    %v1324 = vadd.f32 %v1165, %v1323
    %v1325 = vpop.f32.mrf.mxu0
    %v1326 = vadd.f32 %v1165, %v1325
    %1327 = vdwg.mxu0
    %1328 = vst [vmem:[#allocation7] sm:$0xff] %v1249
    %1329 = vst [vmem:[#allocation7 + $0x8] sm:$0xff] %v1251
    %1330 = vst [vmem:[#allocation7 + $0x10] sm:$0xff] %v1254
    %1331 = vst [vmem:[#allocation7 + $0x18] sm:$0xff] %v1256
    %1332 = vst [vmem:[#allocation7 + $0x20] sm:$0xff] %v1259
    %1333 = vst [vmem:[#allocation7 + $0x28] sm:$0xff] %v1261
    %1334 = vst [vmem:[#allocation7 + $0x30] sm:$0xff] %v1264
    %1335 = vst [vmem:[#allocation7 + $0x38] sm:$0xff] %v1266
    %1336 = vst [vmem:[#allocation7 + $0x40] sm:$0xff] %v1269
    %1337 = vst [vmem:[#allocation7 + $0x48] sm:$0xff] %v1271
    %1338 = vst [vmem:[#allocation7 + $0x50] sm:$0xff] %v1274
    %1339 = vst [vmem:[#allocation7 + $0x58] sm:$0xff] %v1276
    %1340 = vst [vmem:[#allocation7 + $0x60] sm:$0xff] %v1279
    %1341 = vst [vmem:[#allocation7 + $0x68] sm:$0xff] %v1281
    %1342 = vst [vmem:[#allocation7 + $0x70] sm:$0xff] %v1284
    %1343 = vst [vmem:[#allocation7 + $0x78] sm:$0xff] %v1286
    %1344 = vst [vmem:[#allocation7 + $0x80] sm:$0xff] %v1289
    %1345 = vst [vmem:[#allocation7 + $0x88] sm:$0xff] %v1291
    %1346 = vst [vmem:[#allocation7 + $0x90] sm:$0xff] %v1294
    %1347 = vst [vmem:[#allocation7 + $0x98] sm:$0xff] %v1296
    %1348 = vst [vmem:[#allocation7 + $0xa0] sm:$0xff] %v1299
    %1349 = vst [vmem:[#allocation7 + $0xa8] sm:$0xff] %v1301
    %1350 = vst [vmem:[#allocation7 + $0xb0] sm:$0xff] %v1304
    %1351 = vst [vmem:[#allocation7 + $0xb8] sm:$0xff] %v1306
    %1352 = vst [vmem:[#allocation7 + $0xc0] sm:$0xff] %v1309
    %1353 = vst [vmem:[#allocation7 + $0xc8] sm:$0xff] %v1311
    %1354 = vst [vmem:[#allocation7 + $0xd0] sm:$0xff] %v1314
    %1355 = vst [vmem:[#allocation7 + $0xd8] sm:$0xff] %v1316
    %1356 = vst [vmem:[#allocation7 + $0xe0] sm:$0xff] %v1319
    %1357 = vst [vmem:[#allocation7 + $0xe8] sm:$0xff] %v1321
    %1358 = vst [vmem:[#allocation7 + $0xf0] sm:$0xff] %v1324
    %1359 = vst [vmem:[#allocation7 + $0xf8] sm:$0xff] %v1326
    // Predicated region
    $region38: #{tpu_custom_call.1} parent=1 // pred_check
      _
    $region39: #{tpu_custom_call.1} parent=1 // pred_check_branch
      %1361 = sbr.rel (0) target = $region41
    $region40: #{tpu_custom_call.1} parent=1 // pred_region
      %1363 = vsyncadd [#allocation4], 0
      %s1364 = sshll.u32 [#allocation7], 4
      %s1365 = int_to_ptr.vmem [resolvable:$true] %s1364
      %s1366 = sshll.u32 %s7, 4
      %s1367 = int_to_ptr.hbm [resolvable:$true] %s1366
      %1372 = dma.vmem_to_hbm [thread:$0]  %s1365, 4096, %s1367, [#allocation4], 128, 128, 8
    $region41: #{tpu_custom_call.1} parent=1 // pred_fallthru
      _
    // Predicated region
    $region42: #{tpu_custom_call.1} parent=1 // pred_check
      _
    $region43: #{tpu_custom_call.1} parent=1 // pred_check_branch
      %1374 = sbr.rel (0) target = $region45
    $region44: #{tpu_custom_call.1} parent=1 // pred_region
      %1376 = vsyncadd [#allocation9], 0
      %s1377 = sshll.u32 [#allocation8], 4
      %s1378 = int_to_ptr.vmem [resolvable:$true] %s1377
      %s1379 = sshll.u32 %s8, 4
      %s1380 = int_to_ptr.hbm [resolvable:$true] %s1379
      %1385 = dma.vmem_to_hbm [thread:$0]  %s1378, 4096, %s1380, [#allocation9], 128, 128, 8
    $region45: #{tpu_custom_call.1} parent=1 // pred_fallthru
      _
    // Predicated region
    $region46: #{tpu_custom_call.1} parent=1 // pred_check
      _
    $region47: #{tpu_custom_call.1} parent=1 // pred_check_branch
      %1387 = sbr.rel (0) target = $region49
    $region48: #{tpu_custom_call.1} parent=1 // pred_region
      %1389 = dma.done [#allocation4], 4096
    $region49: #{tpu_custom_call.1} parent=1 // pred_fallthru
      _
    // Predicated region
    $region50: #{tpu_custom_call.1} parent=1 // pred_check
      _
    $region51: #{tpu_custom_call.1} parent=1 // pred_check_branch
      %1391 = sbr.rel (0) target = $region53
    $region52: #{tpu_custom_call.1} parent=1 // pred_region
      %1393 = dma.done [#allocation9], 4096
    $region53: #{tpu_custom_call.1} parent=1 // pred_fallthru
      _
    %1394 = vsyncpa [#allocation3], 1
    %1395 = vsyncpa [#allocation6], 1
    %1396 = vsyncpa [#allocation4], 1
    %1397 = vsyncpa [#allocation9], 1

</llo_original>
